<compile_context>
chip_gen: v5e
topology: v5e:2x2
jax: 0.10.0
libtpu: 0.0.40
codegen_flags: <defaults>
</compile_context>

<pallas_src>
import functools
import math

import jax
import jax.numpy as jnp
from jax.experimental import pallas as pl
from jax.experimental.pallas import tpu as pltpu


# ---------------------------------------------------------------------------
# Kernel 1: fused mat_GRU_cell.  One grid step = Tc time steps (in-kernel loop),
# Q carried across chunks in an f32 VMEM scratch.
# ---------------------------------------------------------------------------
def _gru_seq_kernel(wzb_ref, u2_ref, uh_ref, q0_ref, qout_ref, q_carry):
    Tc = wzb_ref.shape[0]
    R = q0_ref.shape[0]

    @pl.when(pl.program_id(0) == 0)
    def _():
        q_carry[...] = q0_ref[...]

    U2 = u2_ref[...]          # (2R, R)  bf16, VMEM resident
    Uh = uh_ref[...]          # (R, R)   bf16, VMEM resident

    def step(t, q):
        # q: (R, Cp) f32 carried GCN weights (prev_Q)
        wzb = wzb_ref[t]                                   # (3R, Cp) f32: W@z + bias
        uq = jnp.dot(U2, q.astype(jnp.bfloat16),
                     preferred_element_type=jnp.float32)   # (2R, Cp)
        u = jax.nn.sigmoid(wzb[0:R] + uq[0:R])             # update gate (f32)
        r = jax.nn.sigmoid(wzb[R:2 * R] + uq[R:2 * R])     # reset gate  (f32)
        htilda = jnp.tanh(
            wzb[2 * R:3 * R]
            + jnp.dot(Uh, (r * q).astype(jnp.bfloat16),
                      preferred_element_type=jnp.float32))
        q_new = (1.0 - u) * q + u * htilda                 # f32 carry
        qout_ref[t] = q_new.astype(qout_ref.dtype)         # bf16 output for GCN kernel
        return q_new

    q_final = jax.lax.fori_loop(0, Tc, step, q_carry[...], unroll=True)
    q_carry[...] = q_final


# ---------------------------------------------------------------------------
# Kernel 2: per-step GCN  activation((Ahat @ X) @ Q_t), row-tiled over nodes,
# parallel over (time, row-tile).
# ---------------------------------------------------------------------------
def _gcn_step_kernel(a_ref, x_ref, q_ref, o_ref):
    # a_ref: (1, tn, N) bf16, x_ref: (1, N, R) bf16, q_ref: (1, R, Cp) bf16
    ax = jnp.dot(a_ref[0], x_ref[0], preferred_element_type=jnp.float32)   # (tn, R)
    out = jnp.dot(ax.astype(jnp.bfloat16), q_ref[0],
                  preferred_element_type=jnp.float32)                      # (tn, Cp)
    # args.activation: ReLU used here (swap for another elementwise fn if needed).
    o_ref[0] = jnp.maximum(out, 0.0).astype(o_ref.dtype)


# ---------------------------------------------------------------------------
# TopK (plain JAX; torch.topk + data-dependent gather has no Pallas equivalent)
# ---------------------------------------------------------------------------
def _topk_embed(node_embs, mask, *, scorer, k):
    scores = (node_embs @ scorer) / jnp.linalg.norm(scorer)   # (N, 1)
    scores = scores + mask
    vals, idx = jax.lax.top_k(scores.reshape(-1), k)
    # TODO(synk): pad_with_last_val for the "< k finite scores" edge case is not implemented.
    out = node_embs[idx] * jnp.tanh(vals)[:, None]            # (k, R)
    return out.T                                              # (R, k)


def _largest_divisor_leq(n, cap):
    d = min(n, cap)
    while n % d:
        d -= 1
    return d


def _pick_row_tile(n, cap=512):
    if n <= cap:
        return n
    for t in (512, 256, 128, 64, 32, 16, 8):
        if n % t == 0:
            return t
    return n


# ---------------------------------------------------------------------------
# GRCU forward wrapper
# ---------------------------------------------------------------------------
@jax.jit
def grcu_forward(params, A_seq, X_seq, M_seq):
    T, N, R = X_seq.shape
    C = params["q0"].shape[1]
    Cp = ((C + 127) // 128) * 128          # lane-dense padded column width
    pad_c = Cp - C
    f32, bf16 = jnp.float32, jnp.bfloat16

    # ---- TopK per time step (vectorized over T) ------------------------------
    z_all = jax.vmap(functools.partial(_topk_embed, scorer=params["scorer"], k=C))(
        X_seq, M_seq)                                         # (T, R, C)
    z_all = jnp.pad(z_all, ((0, 0), (0, 0), (0, pad_c)))      # (T, R, Cp), zero pad

    # ---- hoist input projections out of the recurrence -----------------------
    W_packed = jnp.concatenate(
        [params["Wu"], params["Wr"], params["Wh"]], axis=0)   # (3R, R)
    Bfull = jnp.pad(
        jnp.concatenate([params["bu"], params["br"], params["bh"]], axis=0),
        ((0, 0), (0, pad_c)))                                 # (3R, Cp), zero pad
    # One large, well-pipelined batched matmul outside the serial dependency.
    wzb_all = jnp.einsum("gr,trc->tgc", W_packed, z_all) + Bfull[None]   # (T, 3R, Cp) f32

    U2 = jnp.concatenate([params["Uu"], params["Ur"]], axis=0).astype(bf16)  # (2R, R)
    Uh = params["Uh"].astype(bf16)                                           # (R, R)
    Q0 = jnp.pad(params["q0"], ((0, 0), (0, pad_c)))                         # (R, Cp) f32

    # ---- kernel 1: evolve GCN weights over time (sequential carry) -----------
    # Tc time steps per grid iteration; whole chunk VMEM resident.
    # TODO(synk): for very large T, switch wzb_all streaming to a deeper
    # Buffered() pipeline / smaller Tc so the chunk stays within scoped VMEM.
    Tc = _largest_divisor_leq(T, 16)
    q_seq = pl.pallas_call(
        _gru_seq_kernel,
        out_shape=jax.ShapeDtypeStruct((T, R, Cp), bf16),
        grid=(T // Tc,),
        in_specs=[
            pl.BlockSpec((Tc, 3 * R, Cp), lambda c: (c, 0, 0)),   # W@z+b, streamed per chunk
            pl.BlockSpec((2 * R, R), lambda c: (0, 0)),           # [Uu;Ur]  (VMEM resident)
            pl.BlockSpec((R, R), lambda c: (0, 0)),               # Uh       (VMEM resident)
            pl.BlockSpec((R, Cp), lambda c: (0, 0)),              # Q0       (VMEM resident)
        ],
        out_specs=pl.BlockSpec((Tc, R, Cp), lambda c: (c, 0, 0)),
        scratch_shapes=[pltpu.VMEM((R, Cp), f32)],                # carried hidden Q (f32)
        compiler_params=pltpu.CompilerParams(
            dimension_semantics=("arbitrary",)),
    )(wzb_all, U2, Uh, Q0)

    # ---- kernel 2: per-step GCN, (A @ X) @ Q order, row-tiled over N ----------
    tn = _pick_row_tile(N)
    out_p = pl.pallas_call(
        _gcn_step_kernel,
        out_shape=jax.ShapeDtypeStruct((T, N, Cp), f32),
        grid=(T, N // tn),
        in_specs=[
            pl.BlockSpec((1, tn, N), lambda t, n: (t, n, 0)),     # Ahat row tile (bf16)
            pl.BlockSpec((1, N, R), lambda t, n: (t, 0, 0)),      # node_embs_t   (bf16)
            pl.BlockSpec((1, R, Cp), lambda t, n: (t, 0, 0)),     # evolved GCN weights
        ],
        out_specs=pl.BlockSpec((1, tn, Cp), lambda t, n: (t, n, 0)),
        compiler_params=pltpu.CompilerParams(
            dimension_semantics=("parallel", "parallel")),
    )(A_seq.astype(bf16), X_seq.astype(bf16), q_seq)

    return out_p[:, :, :C]                                        # strip lane padding


# ---------------------------------------------------------------------------
# Pure-JAX reference (mirrors the PyTorch GRCU forward loop)
# ---------------------------------------------------------------------------
def grcu_reference(params, A_seq, X_seq, M_seq):
    T = A_seq.shape[0]
    C = params["q0"].shape[1]
    Q = params["q0"]
    outs = []
    for t in range(T):
        z = _topk_embed(X_seq[t], M_seq[t], scorer=params["scorer"], k=C)
        u = jax.nn.sigmoid(params["Wu"] @ z + params["Uu"] @ Q + params["bu"])
        r = jax.nn.sigmoid(params["Wr"] @ z + params["Ur"] @ Q + params["br"])
        hc = jnp.tanh(params["Wh"] @ z + params["Uh"] @ (r * Q) + params["bh"])
        Q = (1.0 - u) * Q + u * hc
        outs.append(jnp.maximum(A_seq[t] @ (X_seq[t] @ Q), 0.0))
    return jnp.stack(outs)


def init_params(key, R, C, dtype=jnp.float32):
    ks = jax.random.split(key, 8)
    stdv_r = 1.0 / math.sqrt(R)   # reset_param uses t.size(1) == rows for W/U
    stdv_c = 1.0 / math.sqrt(C)   # GCN_init_weights: t.size(1) == out_feats
    uni = lambda k, shape, s: jax.random.uniform(k, shape, dtype, minval=-s, maxval=s)
    return dict(
        Wu=uni(ks[0], (R, R), stdv_r), Uu=uni(ks[1], (R, R), stdv_r), bu=jnp.zeros((R, C), dtype),
        Wr=uni(ks[2], (R, R), stdv_r), Ur=uni(ks[3], (R, R), stdv_r), br=jnp.zeros((R, C), dtype),
        Wh=uni(ks[4], (R, R), stdv_r), Uh=uni(ks[5], (R, R), stdv_r), bh=jnp.zeros((R, C), dtype),
        scorer=uni(ks[6], (R, 1), stdv_r),
        q0=uni(ks[7], (R, C), stdv_c),
    )


if __name__ == "__main__":
    # Small shapes consistent with the module: T time steps, N nodes,
    # in_feats (rows) = 32, out_feats (cols) = 16.
    T, N, R, C = 4, 64, 32, 16

    key = jax.random.PRNGKey(0)
    kp, ka, kx = jax.random.split(key, 3)

    params = init_params(kp, R, C)
    A_seq = jax.random.uniform(ka, (T, N, N), jnp.float32) / N   # Ahat per step
    X_seq = jax.random.normal(kx, (T, N, R), jnp.float32)        # node_embs per step
    M_seq = jnp.zeros((T, N, 1), jnp.float32)                    # masks (no -inf entries)

    out = grcu_forward(params, A_seq, X_seq, M_seq)
    out = jax.block_until_ready(out)

    ref = grcu_reference(params, A_seq, X_seq, M_seq)
    assert out.shape == (T, N, C)
    max_err = float(jnp.max(jnp.abs(out - ref)))
    assert jnp.allclose(out, ref, atol=2e-2, rtol=2e-2), f"max abs err {max_err}"

    print("KERNEL_OK")
</pallas_src>

<mosaic_0001>
module attributes {stable_mosaic.version = 11 : i64} {
  func.func @_gru_seq_kernel(%arg0: i32, %arg1: memref<4x96x128xf32, #tpu.memory_space<vmem>>, %arg2: memref<64x32xbf16, #tpu.memory_space<vmem>>, %arg3: memref<32x32xbf16, #tpu.memory_space<vmem>>, %arg4: memref<32x128xf32, #tpu.memory_space<vmem>>, %arg5: memref<4x32x128xbf16, #tpu.memory_space<vmem>>, %arg6: memref<32x128xf32, #tpu.memory_space<vmem>>) attributes {dimension_semantics = [#tpu.dimension_semantics<arbitrary>], iteration_bounds = array<i64: 1>, scalar_prefetch = 0 : i64, scratch_operands = 1 : i64, tpu.core_type = #tpu.core_type<tc>, window_params = [{transform_indices = @transform_0, window_bounds = array<i64: 4, 96, 128>}, {pipeline_mode = #tpu.pipeline_mode<synchronous>, transform_indices = @transform_1, window_bounds = array<i64: 64, 32>}, {pipeline_mode = #tpu.pipeline_mode<synchronous>, transform_indices = @transform_2, window_bounds = array<i64: 32, 32>}, {pipeline_mode = #tpu.pipeline_mode<synchronous>, transform_indices = @transform_3, window_bounds = array<i64: 32, 128>}, {transform_indices = @transform_4, window_bounds = array<i64: 4, 32, 128>}]} {
    %c0_i32 = arith.constant 0 : i32
    %0 = arith.cmpi eq, %arg0, %c0_i32 : i32
    %1 = arith.extui %0 : i1 to i32
    %c0_i32_0 = arith.constant 0 : i32
    %2 = arith.cmpi ne, %1, %c0_i32_0 : i32
    scf.if %2 {
      %c0_44 = arith.constant 0 : index
      %c0_45 = arith.constant 0 : index
      %155 = vector.load %arg4[%c0_44, %c0_45] : memref<32x128xf32, #tpu.memory_space<vmem>>, vector<32x128xf32>
      %c0_46 = arith.constant 0 : index
      %c0_47 = arith.constant 0 : index
      %156 = vector.load %arg6[%c0_46, %c0_47] : memref<32x128xf32, #tpu.memory_space<vmem>>, vector<32x128xf32>
      tpu.vector_store %arg6[%c0_46, %c0_47], %155 {strides = array<i32>} : memref<32x128xf32, #tpu.memory_space<vmem>>, vector<32x128xf32>,
    } else {
    }
    %c0 = arith.constant 0 : index
    %c0_1 = arith.constant 0 : index
    %3 = vector.load %arg2[%c0, %c0_1] : memref<64x32xbf16, #tpu.memory_space<vmem>>, vector<64x32xbf16>
    %c0_2 = arith.constant 0 : index
    %c0_3 = arith.constant 0 : index
    %4 = vector.load %arg3[%c0_2, %c0_3] : memref<32x32xbf16, #tpu.memory_space<vmem>>, vector<32x32xbf16>
    %c0_4 = arith.constant 0 : index
    %c0_5 = arith.constant 0 : index
    %5 = vector.load %arg6[%c0_4, %c0_5] : memref<32x128xf32, #tpu.memory_space<vmem>>, vector<32x128xf32>
    %c0_i32_6 = arith.constant 0 : i32
    %6 = arith.index_cast %c0_i32_6 : i32 to index
    %c0_7 = arith.constant 0 : index
    %c0_8 = arith.constant 0 : index
    %7 = vector.load %arg1[%6, %c0_7, %c0_8] : memref<4x96x128xf32, #tpu.memory_space<vmem>>, vector<1x96x128xf32>
    %8 = vector.shape_cast %7 : vector<1x96x128xf32> to vector<96x128xf32>
    %9 = arith.truncf %5 : vector<32x128xf32> to vector<32x128xbf16>
    %cst = arith.constant dense<0.000000e+00> : vector<64x128xf32>
    %10 = tpu.matmul %3, %9, %cst {dimension_numbers = #tpu.dot_dimension_numbers<[1], [0], [0], [1], [0, 0, 1, 1], [], []>} : vector<64x32xbf16>, vector<32x128xbf16>, vector<64x128xf32> -> vector<64x128xf32>
    %11 = vector.extract_strided_slice %8 {offsets = [0, 0], sizes = [32, 128], strides = [1, 1]} : vector<96x128xf32> to vector<32x128xf32>
    %12 = vector.extract_strided_slice %10 {offsets = [0, 0], sizes = [32, 128], strides = [1, 1]} : vector<64x128xf32> to vector<32x128xf32>
    %13 = arith.addf %11, %12 : vector<32x128xf32>
    %14 = arith.negf %13 : vector<32x128xf32>
    %15 = math.exp %14 : vector<32x128xf32>
    %cst_9 = arith.constant 1.000000e+00 : f32
    %16 = vector.broadcast %cst_9 : f32 to vector<32x128xf32>
    %17 = arith.addf %16, %15 : vector<32x128xf32>
    %18 = arith.divf %16, %17 : vector<32x128xf32>
    %19 = vector.extract_strided_slice %8 {offsets = [32, 0], sizes = [32, 128], strides = [1, 1]} : vector<96x128xf32> to vector<32x128xf32>
    %20 = vector.extract_strided_slice %10 {offsets = [32, 0], sizes = [32, 128], strides = [1, 1]} : vector<64x128xf32> to vector<32x128xf32>
    %21 = arith.addf %19, %20 : vector<32x128xf32>
    %22 = arith.negf %21 : vector<32x128xf32>
    %23 = math.exp %22 : vector<32x128xf32>
    %cst_10 = arith.constant 1.000000e+00 : f32
    %24 = vector.broadcast %cst_10 : f32 to vector<32x128xf32>
    %25 = arith.addf %24, %23 : vector<32x128xf32>
    %26 = arith.divf %24, %25 : vector<32x128xf32>
    %27 = vector.extract_strided_slice %8 {offsets = [64, 0], sizes = [32, 128], strides = [1, 1]} : vector<96x128xf32> to vector<32x128xf32>
    %28 = arith.mulf %26, %5 : vector<32x128xf32>
    %29 = arith.truncf %28 : vector<32x128xf32> to vector<32x128xbf16>
    %cst_11 = arith.constant dense<0.000000e+00> : vector<32x128xf32>
    %30 = tpu.matmul %4, %29, %cst_11 {dimension_numbers = #tpu.dot_dimension_numbers<[1], [0], [0], [1], [0, 0, 1, 1], [], []>} : vector<32x32xbf16>, vector<32x128xbf16>, vector<32x128xf32> -> vector<32x128xf32>
    %31 = arith.addf %27, %30 : vector<32x128xf32>
    %32 = math.tanh %31 : vector<32x128xf32>
    %cst_12 = arith.constant 1.000000e+00 : f32
    %33 = vector.broadcast %cst_12 : f32 to vector<32x128xf32>
    %34 = arith.subf %33, %18 : vector<32x128xf32>
    %35 = arith.mulf %34, %5 : vector<32x128xf32>
    %36 = arith.mulf %18, %32 : vector<32x128xf32>
    %37 = arith.addf %35, %36 : vector<32x128xf32>
    %38 = arith.truncf %37 : vector<32x128xf32> to vector<32x128xbf16>
    %39 = arith.index_cast %c0_i32_6 : i32 to index
    %c0_13 = arith.constant 0 : index
    %c0_14 = arith.constant 0 : index
    %40 = vector.load %arg5[%39, %c0_13, %c0_14] : memref<4x32x128xbf16, #tpu.memory_space<vmem>>, vector<1x32x128xbf16>
    %41 = vector.shape_cast %40 : vector<1x32x128xbf16> to vector<32x128xbf16>
    %42 = vector.shape_cast %38 : vector<32x128xbf16> to vector<1x32x128xbf16>
    tpu.vector_store %arg5[%39, %c0_13, %c0_14], %42 {strides = array<i32>} : memref<4x32x128xbf16, #tpu.memory_space<vmem>>, vector<1x32x128xbf16>,
    %c1_i32 = arith.constant 1 : i32
    %43 = arith.index_cast %c1_i32 : i32 to index
    %c0_15 = arith.constant 0 : index
    %c0_16 = arith.constant 0 : index
    %44 = vector.load %arg1[%43, %c0_15, %c0_16] : memref<4x96x128xf32, #tpu.memory_space<vmem>>, vector<1x96x128xf32>
    %45 = vector.shape_cast %44 : vector<1x96x128xf32> to vector<96x128xf32>
    %46 = arith.truncf %37 : vector<32x128xf32> to vector<32x128xbf16>
    %cst_17 = arith.constant dense<0.000000e+00> : vector<64x128xf32>
    %47 = tpu.matmul %3, %46, %cst_17 {dimension_numbers = #tpu.dot_dimension_numbers<[1], [0], [0], [1], [0, 0, 1, 1], [], []>} : vector<64x32xbf16>, vector<32x128xbf16>, vector<64x128xf32> -> vector<64x128xf32>
    %48 = vector.extract_strided_slice %45 {offsets = [0, 0], sizes = [32, 128], strides = [1, 1]} : vector<96x128xf32> to vector<32x128xf32>
    %49 = vector.extract_strided_slice %47 {offsets = [0, 0], sizes = [32, 128], strides = [1, 1]} : vector<64x128xf32> to vector<32x128xf32>
    %50 = arith.addf %48, %49 : vector<32x128xf32>
    %51 = arith.negf %50 : vector<32x128xf32>
    %52 = math.exp %51 : vector<32x128xf32>
    %cst_18 = arith.constant 1.000000e+00 : f32
    %53 = vector.broadcast %cst_18 : f32 to vector<32x128xf32>
    %54 = arith.addf %53, %52 : vector<32x128xf32>
    %55 = arith.divf %53, %54 : vector<32x128xf32>
    %56 = vector.extract_strided_slice %45 {offsets = [32, 0], sizes = [32, 128], strides = [1, 1]} : vector<96x128xf32> to vector<32x128xf32>
    %57 = vector.extract_strided_slice %47 {offsets = [32, 0], sizes = [32, 128], strides = [1, 1]} : vector<64x128xf32> to vector<32x128xf32>
    %58 = arith.addf %56, %57 : vector<32x128xf32>
    %59 = arith.negf %58 : vector<32x128xf32>
    %60 = math.exp %59 : vector<32x128xf32>
    %cst_19 = arith.constant 1.000000e+00 : f32
    %61 = vector.broadcast %cst_19 : f32 to vector<32x128xf32>
    %62 = arith.addf %61, %60 : vector<32x128xf32>
    %63 = arith.divf %61, %62 : vector<32x128xf32>
    %64 = vector.extract_strided_slice %45 {offsets = [64, 0], sizes = [32, 128], strides = [1, 1]} : vector<96x128xf32> to vector<32x128xf32>
    %65 = arith.mulf %63, %37 : vector<32x128xf32>
    %66 = arith.truncf %65 : vector<32x128xf32> to vector<32x128xbf16>
    %cst_20 = arith.constant dense<0.000000e+00> : vector<32x128xf32>
    %67 = tpu.matmul %4, %66, %cst_20 {dimension_numbers = #tpu.dot_dimension_numbers<[1], [0], [0], [1], [0, 0, 1, 1], [], []>} : vector<32x32xbf16>, vector<32x128xbf16>, vector<32x128xf32> -> vector<32x128xf32>
    %68 = arith.addf %64, %67 : vector<32x128xf32>
    %69 = math.tanh %68 : vector<32x128xf32>
    %cst_21 = arith.constant 1.000000e+00 : f32
    %70 = vector.broadcast %cst_21 : f32 to vector<32x128xf32>
    %71 = arith.subf %70, %55 : vector<32x128xf32>
    %72 = arith.mulf %71, %37 : vector<32x128xf32>
    %73 = arith.mulf %55, %69 : vector<32x128xf32>
    %74 = arith.addf %72, %73 : vector<32x128xf32>
    %75 = arith.truncf %74 : vector<32x128xf32> to vector<32x128xbf16>
    %76 = arith.index_cast %c1_i32 : i32 to index
    %c0_22 = arith.constant 0 : index
    %c0_23 = arith.constant 0 : index
    %77 = vector.load %arg5[%76, %c0_22, %c0_23] : memref<4x32x128xbf16, #tpu.memory_space<vmem>>, vector<1x32x128xbf16>
    %78 = vector.shape_cast %77 : vector<1x32x128xbf16> to vector<32x128xbf16>
    %79 = vector.shape_cast %75 : vector<32x128xbf16> to vector<1x32x128xbf16>
    tpu.vector_store %arg5[%76, %c0_22, %c0_23], %79 {strides = array<i32>} : memref<4x32x128xbf16, #tpu.memory_space<vmem>>, vector<1x32x128xbf16>,
    %c2_i32 = arith.constant 2 : i32
    %80 = arith.index_cast %c2_i32 : i32 to index
    %c0_24 = arith.constant 0 : index
    %c0_25 = arith.constant 0 : index
    %81 = vector.load %arg1[%80, %c0_24, %c0_25] : memref<4x96x128xf32, #tpu.memory_space<vmem>>, vector<1x96x128xf32>
    %82 = vector.shape_cast %81 : vector<1x96x128xf32> to vector<96x128xf32>
    %83 = arith.truncf %74 : vector<32x128xf32> to vector<32x128xbf16>
    %cst_26 = arith.constant dense<0.000000e+00> : vector<64x128xf32>
    %84 = tpu.matmul %3, %83, %cst_26 {dimension_numbers = #tpu.dot_dimension_numbers<[1], [0], [0], [1], [0, 0, 1, 1], [], []>} : vector<64x32xbf16>, vector<32x128xbf16>, vector<64x128xf32> -> vector<64x128xf32>
    %85 = vector.extract_strided_slice %82 {offsets = [0, 0], sizes = [32, 128], strides = [1, 1]} : vector<96x128xf32> to vector<32x128xf32>
    %86 = vector.extract_strided_slice %84 {offsets = [0, 0], sizes = [32, 128], strides = [1, 1]} : vector<64x128xf32> to vector<32x128xf32>
    %87 = arith.addf %85, %86 : vector<32x128xf32>
    %88 = arith.negf %87 : vector<32x128xf32>
    %89 = math.exp %88 : vector<32x128xf32>
    %cst_27 = arith.constant 1.000000e+00 : f32
    %90 = vector.broadcast %cst_27 : f32 to vector<32x128xf32>
    %91 = arith.addf %90, %89 : vector<32x128xf32>
    %92 = arith.divf %90, %91 : vector<32x128xf32>
    %93 = vector.extract_strided_slice %82 {offsets = [32, 0], sizes = [32, 128], strides = [1, 1]} : vector<96x128xf32> to vector<32x128xf32>
    %94 = vector.extract_strided_slice %84 {offsets = [32, 0], sizes = [32, 128], strides = [1, 1]} : vector<64x128xf32> to vector<32x128xf32>
    %95 = arith.addf %93, %94 : vector<32x128xf32>
    %96 = arith.negf %95 : vector<32x128xf32>
    %97 = math.exp %96 : vector<32x128xf32>
    %cst_28 = arith.constant 1.000000e+00 : f32
    %98 = vector.broadcast %cst_28 : f32 to vector<32x128xf32>
    %99 = arith.addf %98, %97 : vector<32x128xf32>
    %100 = arith.divf %98, %99 : vector<32x128xf32>
    %101 = vector.extract_strided_slice %82 {offsets = [64, 0], sizes = [32, 128], strides = [1, 1]} : vector<96x128xf32> to vector<32x128xf32>
    %102 = arith.mulf %100, %74 : vector<32x128xf32>
    %103 = arith.truncf %102 : vector<32x128xf32> to vector<32x128xbf16>
    %cst_29 = arith.constant dense<0.000000e+00> : vector<32x128xf32>
    %104 = tpu.matmul %4, %103, %cst_29 {dimension_numbers = #tpu.dot_dimension_numbers<[1], [0], [0], [1], [0, 0, 1, 1], [], []>} : vector<32x32xbf16>, vector<32x128xbf16>, vector<32x128xf32> -> vector<32x128xf32>
    %105 = arith.addf %101, %104 : vector<32x128xf32>
    %106 = math.tanh %105 : vector<32x128xf32>
    %cst_30 = arith.constant 1.000000e+00 : f32
    %107 = vector.broadcast %cst_30 : f32 to vector<32x128xf32>
    %108 = arith.subf %107, %92 : vector<32x128xf32>
    %109 = arith.mulf %108, %74 : vector<32x128xf32>
    %110 = arith.mulf %92, %106 : vector<32x128xf32>
    %111 = arith.addf %109, %110 : vector<32x128xf32>
    %112 = arith.truncf %111 : vector<32x128xf32> to vector<32x128xbf16>
    %113 = arith.index_cast %c2_i32 : i32 to index
    %c0_31 = arith.constant 0 : index
    %c0_32 = arith.constant 0 : index
    %114 = vector.load %arg5[%113, %c0_31, %c0_32] : memref<4x32x128xbf16, #tpu.memory_space<vmem>>, vector<1x32x128xbf16>
    %115 = vector.shape_cast %114 : vector<1x32x128xbf16> to vector<32x128xbf16>
    %116 = vector.shape_cast %112 : vector<32x128xbf16> to vector<1x32x128xbf16>
    tpu.vector_store %arg5[%113, %c0_31, %c0_32], %116 {strides = array<i32>} : memref<4x32x128xbf16, #tpu.memory_space<vmem>>, vector<1x32x128xbf16>,
    %c3_i32 = arith.constant 3 : i32
    %117 = arith.index_cast %c3_i32 : i32 to index
    %c0_33 = arith.constant 0 : index
    %c0_34 = arith.constant 0 : index
    %118 = vector.load %arg1[%117, %c0_33, %c0_34] : memref<4x96x128xf32, #tpu.memory_space<vmem>>, vector<1x96x128xf32>
    %119 = vector.shape_cast %118 : vector<1x96x128xf32> to vector<96x128xf32>
    %120 = arith.truncf %111 : vector<32x128xf32> to vector<32x128xbf16>
    %cst_35 = arith.constant dense<0.000000e+00> : vector<64x128xf32>
    %121 = tpu.matmul %3, %120, %cst_35 {dimension_numbers = #tpu.dot_dimension_numbers<[1], [0], [0], [1], [0, 0, 1, 1], [], []>} : vector<64x32xbf16>, vector<32x128xbf16>, vector<64x128xf32> -> vector<64x128xf32>
    %122 = vector.extract_strided_slice %119 {offsets = [0, 0], sizes = [32, 128], strides = [1, 1]} : vector<96x128xf32> to vector<32x128xf32>
    %123 = vector.extract_strided_slice %121 {offsets = [0, 0], sizes = [32, 128], strides = [1, 1]} : vector<64x128xf32> to vector<32x128xf32>
    %124 = arith.addf %122, %123 : vector<32x128xf32>
    %125 = arith.negf %124 : vector<32x128xf32>
    %126 = math.exp %125 : vector<32x128xf32>
    %cst_36 = arith.constant 1.000000e+00 : f32
    %127 = vector.broadcast %cst_36 : f32 to vector<32x128xf32>
    %128 = arith.addf %127, %126 : vector<32x128xf32>
    %129 = arith.divf %127, %128 : vector<32x128xf32>
    %130 = vector.extract_strided_slice %119 {offsets = [32, 0], sizes = [32, 128], strides = [1, 1]} : vector<96x128xf32> to vector<32x128xf32>
    %131 = vector.extract_strided_slice %121 {offsets = [32, 0], sizes = [32, 128], strides = [1, 1]} : vector<64x128xf32> to vector<32x128xf32>
    %132 = arith.addf %130, %131 : vector<32x128xf32>
    %133 = arith.negf %132 : vector<32x128xf32>
    %134 = math.exp %133 : vector<32x128xf32>
    %cst_37 = arith.constant 1.000000e+00 : f32
    %135 = vector.broadcast %cst_37 : f32 to vector<32x128xf32>
    %136 = arith.addf %135, %134 : vector<32x128xf32>
    %137 = arith.divf %135, %136 : vector<32x128xf32>
    %138 = vector.extract_strided_slice %119 {offsets = [64, 0], sizes = [32, 128], strides = [1, 1]} : vector<96x128xf32> to vector<32x128xf32>
    %139 = arith.mulf %137, %111 : vector<32x128xf32>
    %140 = arith.truncf %139 : vector<32x128xf32> to vector<32x128xbf16>
    %cst_38 = arith.constant dense<0.000000e+00> : vector<32x128xf32>
    %141 = tpu.matmul %4, %140, %cst_38 {dimension_numbers = #tpu.dot_dimension_numbers<[1], [0], [0], [1], [0, 0, 1, 1], [], []>} : vector<32x32xbf16>, vector<32x128xbf16>, vector<32x128xf32> -> vector<32x128xf32>
    %142 = arith.addf %138, %141 : vector<32x128xf32>
    %143 = math.tanh %142 : vector<32x128xf32>
    %cst_39 = arith.constant 1.000000e+00 : f32
    %144 = vector.broadcast %cst_39 : f32 to vector<32x128xf32>
    %145 = arith.subf %144, %129 : vector<32x128xf32>
    %146 = arith.mulf %145, %111 : vector<32x128xf32>
    %147 = arith.mulf %129, %143 : vector<32x128xf32>
    %148 = arith.addf %146, %147 : vector<32x128xf32>
    %149 = arith.truncf %148 : vector<32x128xf32> to vector<32x128xbf16>
    %150 = arith.index_cast %c3_i32 : i32 to index
    %c0_40 = arith.constant 0 : index
    %c0_41 = arith.constant 0 : index
    %151 = vector.load %arg5[%150, %c0_40, %c0_41] : memref<4x32x128xbf16, #tpu.memory_space<vmem>>, vector<1x32x128xbf16>
    %152 = vector.shape_cast %151 : vector<1x32x128xbf16> to vector<32x128xbf16>
    %153 = vector.shape_cast %149 : vector<32x128xbf16> to vector<1x32x128xbf16>
    tpu.vector_store %arg5[%150, %c0_40, %c0_41], %153 {strides = array<i32>} : memref<4x32x128xbf16, #tpu.memory_space<vmem>>, vector<1x32x128xbf16>,
    %c4_i32 = arith.constant 4 : i32
    %c0_42 = arith.constant 0 : index
    %c0_43 = arith.constant 0 : index
    %154 = vector.load %arg6[%c0_42, %c0_43] : memref<32x128xf32, #tpu.memory_space<vmem>>, vector<32x128xf32>
    tpu.vector_store %arg6[%c0_42, %c0_43], %148 {strides = array<i32>} : memref<32x128xf32, #tpu.memory_space<vmem>>, vector<32x128xf32>,
    return
  }
  func.func @transform_0(%arg0: i32) -> (i32, i32, i32) {
    %c0_i32 = arith.constant 0 : i32
    %c0_i32_0 = arith.constant 0 : i32
    %c0_i32_1 = arith.constant 0 : i32
    return %arg0, %c0_i32, %c0_i32_0 : i32, i32, i32
  }
  func.func @transform_1(%arg0: i32) -> (i32, i32) {
    %c0_i32 = arith.constant 0 : i32
    %c0_i32_0 = arith.constant 0 : i32
    %c0_i32_1 = arith.constant 0 : i32
    return %c0_i32, %c0_i32_0 : i32, i32
  }
  func.func @transform_2(%arg0: i32) -> (i32, i32) {
    %c0_i32 = arith.constant 0 : i32
    %c0_i32_0 = arith.constant 0 : i32
    %c0_i32_1 = arith.constant 0 : i32
    return %c0_i32, %c0_i32_0 : i32, i32
  }
  func.func @transform_3(%arg0: i32) -> (i32, i32) {
    %c0_i32 = arith.constant 0 : i32
    %c0_i32_0 = arith.constant 0 : i32
    %c0_i32_1 = arith.constant 0 : i32
    return %c0_i32, %c0_i32_0 : i32, i32
  }
  func.func @transform_4(%arg0: i32) -> (i32, i32, i32) {
    %c0_i32 = arith.constant 0 : i32
    %c0_i32_0 = arith.constant 0 : i32
    %c0_i32_1 = arith.constant 0 : i32
    return %arg0, %c0_i32, %c0_i32_0 : i32, i32, i32
  }
}

module attributes {stable_mosaic.version = 11 : i64} {
  func.func @_gcn_step_kernel(%arg0: i32, %arg1: i32, %arg2: memref<1x64x64xbf16, #tpu.memory_space<vmem>>, %arg3: memref<1x64x32xbf16, #tpu.memory_space<vmem>>, %arg4: memref<1x32x128xbf16, #tpu.memory_space<vmem>>, %arg5: memref<1x64x128xf32, #tpu.memory_space<vmem>>) attributes {dimension_semantics = [#tpu.dimension_semantics<parallel>, #tpu.dimension_semantics<parallel>], iteration_bounds = array<i64: 4, 1>, scalar_prefetch = 0 : i64, scratch_operands = 0 : i64, tpu.core_type = #tpu.core_type<tc>, window_params = [{transform_indices = @transform_0, window_bounds = array<i64: 1, 64, 64>}, {transform_indices = @transform_1, window_bounds = array<i64: 1, 64, 32>}, {transform_indices = @transform_2, window_bounds = array<i64: 1, 32, 128>}, {transform_indices = @transform_3, window_bounds = array<i64: 1, 64, 128>}]} {
    %c0 = arith.constant 0 : index
    %c0_0 = arith.constant 0 : index
    %c0_1 = arith.constant 0 : index
    %0 = vector.load %arg2[%c0, %c0_0, %c0_1] : memref<1x64x64xbf16, #tpu.memory_space<vmem>>, vector<1x64x64xbf16>
    %1 = vector.shape_cast %0 : vector<1x64x64xbf16> to vector<64x64xbf16>
    %c0_2 = arith.constant 0 : index
    %c0_3 = arith.constant 0 : index
    %c0_4 = arith.constant 0 : index
    %2 = vector.load %arg3[%c0_2, %c0_3, %c0_4] : memref<1x64x32xbf16, #tpu.memory_space<vmem>>, vector<1x64x32xbf16>
    %3 = vector.shape_cast %2 : vector<1x64x32xbf16> to vector<64x32xbf16>
    %cst = arith.constant dense<0.000000e+00> : vector<64x32xf32>
    %4 = tpu.matmul %1, %3, %cst {dimension_numbers = #tpu.dot_dimension_numbers<[1], [0], [0], [1], [0, 0, 1, 1], [], []>} : vector<64x64xbf16>, vector<64x32xbf16>, vector<64x32xf32> -> vector<64x32xf32>
    %5 = arith.truncf %4 : vector<64x32xf32> to vector<64x32xbf16>
    %c0_5 = arith.constant 0 : index
    %c0_6 = arith.constant 0 : index
    %c0_7 = arith.constant 0 : index
    %6 = vector.load %arg4[%c0_5, %c0_6, %c0_7] : memref<1x32x128xbf16, #tpu.memory_space<vmem>>, vector<1x32x128xbf16>
    %7 = vector.shape_cast %6 : vector<1x32x128xbf16> to vector<32x128xbf16>
    %cst_8 = arith.constant dense<0.000000e+00> : vector<64x128xf32>
    %8 = tpu.matmul %5, %7, %cst_8 {dimension_numbers = #tpu.dot_dimension_numbers<[1], [0], [0], [1], [0, 0, 1, 1], [], []>} : vector<64x32xbf16>, vector<32x128xbf16>, vector<64x128xf32> -> vector<64x128xf32>
    %cst_9 = arith.constant 0.000000e+00 : f32
    %9 = vector.broadcast %cst_9 : f32 to vector<64x128xf32>
    %10 = arith.maximumf %8, %9 : vector<64x128xf32>
    %c0_10 = arith.constant 0 : index
    %c0_11 = arith.constant 0 : index
    %c0_12 = arith.constant 0 : index
    %11 = vector.load %arg5[%c0_10, %c0_11, %c0_12] : memref<1x64x128xf32, #tpu.memory_space<vmem>>, vector<1x64x128xf32>
    %12 = vector.shape_cast %11 : vector<1x64x128xf32> to vector<64x128xf32>
    %13 = vector.shape_cast %10 : vector<64x128xf32> to vector<1x64x128xf32>
    tpu.vector_store %arg5[%c0_10, %c0_11, %c0_12], %13 {strides = array<i32>} : memref<1x64x128xf32, #tpu.memory_space<vmem>>, vector<1x64x128xf32>,
    return
  }
  func.func @transform_0(%arg0: i32, %arg1: i32) -> (i32, i32, i32) {
    %c0_i32 = arith.constant 0 : i32
    %c0_i32_0 = arith.constant 0 : i32
    return %arg0, %arg1, %c0_i32 : i32, i32, i32
  }
  func.func @transform_1(%arg0: i32, %arg1: i32) -> (i32, i32, i32) {
    %c0_i32 = arith.constant 0 : i32
    %c0_i32_0 = arith.constant 0 : i32
    %c0_i32_1 = arith.constant 0 : i32
    return %arg0, %c0_i32, %c0_i32_0 : i32, i32, i32
  }
  func.func @transform_2(%arg0: i32, %arg1: i32) -> (i32, i32, i32) {
    %c0_i32 = arith.constant 0 : i32
    %c0_i32_0 = arith.constant 0 : i32
    %c0_i32_1 = arith.constant 0 : i32
    return %arg0, %c0_i32, %c0_i32_0 : i32, i32, i32
  }
  func.func @transform_3(%arg0: i32, %arg1: i32) -> (i32, i32, i32) {
    %c0_i32 = arith.constant 0 : i32
    %c0_i32_0 = arith.constant 0 : i32
    return %arg0, %arg1, %c0_i32 : i32, i32, i32
  }
}

</mosaic_0001>

<llo_original>
// kernel: grcu_forward.3
$region0: #{grcu_forward.3}
  #allocation0 [shape = 'u32[]', space=smem, size = 0x4, offset = 0x4, fixed_abs, tag = 'smem constant byte address 0x4 - core index']
  #allocation1 [shape = 'u32[72,128]{1,0:T(1,128)}', space=vmem, size = 0x9000, scoped, tag = 'internal scratch']
  %s0 = inlined_call_operand.vmem [shape: bf16[4,64,64], index: 0, kind: input, shape index: {}]
  %s1 = inlined_call_operand.vmem [shape: bf16[4,64,32], index: 1, kind: input, shape index: {}]
  %s2 = inlined_call_operand.vmem [shape: bf16[4,32,128], index: 2, kind: input, shape index: {}]
  %s3 = inlined_call_operand.vmem [shape: f32[4,64,128], index: 3, kind: output, shape index: {}]
  %s4 = sld [smem:[#allocation0]]
  $region45: #{grcu_forward.3} parent=0
    _
  %s6 = ssub.s32 1, %s4
  %s7 = scalar_select 0, %s6, %s4
  loop: start=0, step=1, limit=6
  $region2: #{grcu_forward.3} parent=0 // loop_pre_header
    _
  $region3: #{grcu_forward.3} parent=0 // loop_header
    %s9 = sphi 0, %s13
    %p10 = scmp.ge.s32.totalorder %s9, 6
    %s16 = sphi 0, %s28
    %s17 = sphi 0, %s24
    %s18 = sphi 0, %s16
    %s19 = sphi 0, %s17
    %s20 = sphi 0, %s18
    %s21 = sphi 0, %s19
    %s33 = sphi 0, %s35
    %s36 = sphi 0, %s33
    %s37 = sphi 0, %s36
    %s53 = sphi 0, %s37
    %s59 = sphi 0, %s61
    %s62 = sphi 0, %s59
    %s63 = sphi 0, %s62
    %s79 = sphi 0, %s63
    %s85 = sphi 0, %s87
    %s88 = sphi 0, %s85
    %s89 = sphi 0, %s88
    %s105 = sphi 0, %s89
    %s113 = sphi 0, %s115
    %s116 = sphi 0, %s113
    %s117 = sphi 0, %s116
    %s133 = sphi 0, %s117
  $region4: #{grcu_forward.3} parent=0 // loop_header_branch
    %12 = sbr.rel (%p10) target = $region8
  $region5: #{grcu_forward.3} parent=0 // loop_body
    %s14 = ssub.s32 %s9, 1
    %s15 = ssub.s32 %s9, 2
    %s22 = sadd.s32 1, %s17
    %p23 = scmp.ge.s32.totalorder %s22, 1
    %s24 = scalar_select %p23, 0, %s22
    %s25 = sadd.s32 1, %s16
    %s26 = scalar_select %p23, %s25, %s16
    %p27 = scmp.ge.s32.totalorder %s26, 4
    %s28 = scalar_select %p27, 0, %s26
    %s29 = ssub.s32 %s16, %s28
    %s30 = ssub.s32 %s17, %s24
    %s31 = sor.u32 %s29, %s30
    %p32 = scmp.eq.s32.totalorder %s31, 0
    %s34 = sadd.s32 %s33, 1
    %s35 = scalar_select %p32, %s33, %s34
    %p38 = pneg %p32
    %p39 = scmp.eq.s32.totalorder %s9, 3
    %p40 = por %p38, %p39
    %p41 = scmp.ne.s32.totalorder %s33, %s36
    %p42 = scmp.eq.s32.totalorder %s9, 0
    %p43 = por %p41, %p42
    %p44 = scmp.ne.s32.totalorder %s33, %s36
    %p45 = scmp.eq.s32.totalorder %s14, 3
    %p46 = por %p44, %p45
    %p47 = scmp.ne.s32.totalorder %s36, %s37
    %p48 = scmp.eq.s32.totalorder %s14, 0
    %p49 = por %p47, %p48
    %p50 = scmp.ne.s32.totalorder %s36, %s37
    %p51 = scmp.eq.s32.totalorder %s15, 3
    %p52 = por %p50, %p51
    %p54 = scmp.ne.s32.totalorder %s37, %s53
    %p55 = scmp.eq.s32.totalorder %s15, 0
    %p56 = por %p54, %p55
    %s57 = ssub.s32 %s16, %s28
    %p58 = scmp.eq.s32.totalorder %s57, 0
    %s60 = sadd.s32 %s59, 1
    %s61 = scalar_select %p58, %s59, %s60
    %p64 = pneg %p58
    %p65 = scmp.eq.s32.totalorder %s9, 3
    %p66 = por %p64, %p65
    %p67 = scmp.ne.s32.totalorder %s59, %s62
    %p68 = scmp.eq.s32.totalorder %s9, 0
    %p69 = por %p67, %p68
    %p70 = scmp.ne.s32.totalorder %s59, %s62
    %p71 = scmp.eq.s32.totalorder %s14, 3
    %p72 = por %p70, %p71
    %p73 = scmp.ne.s32.totalorder %s62, %s63
    %p74 = scmp.eq.s32.totalorder %s14, 0
    %p75 = por %p73, %p74
    %p76 = scmp.ne.s32.totalorder %s62, %s63
    %p77 = scmp.eq.s32.totalorder %s15, 3
    %p78 = por %p76, %p77
    %p80 = scmp.ne.s32.totalorder %s63, %s79
    %p81 = scmp.eq.s32.totalorder %s15, 0
    %p82 = por %p80, %p81
    %s83 = ssub.s32 %s16, %s28
    %p84 = scmp.eq.s32.totalorder %s83, 0
    %s86 = sadd.s32 %s85, 1
    %s87 = scalar_select %p84, %s85, %s86
    %p90 = pneg %p84
    %p91 = scmp.eq.s32.totalorder %s9, 3
    %p92 = por %p90, %p91
    %p93 = scmp.ne.s32.totalorder %s85, %s88
    %p94 = scmp.eq.s32.totalorder %s9, 0
    %p95 = por %p93, %p94
    %p96 = scmp.ne.s32.totalorder %s85, %s88
    %p97 = scmp.eq.s32.totalorder %s14, 3
    %p98 = por %p96, %p97
    %p99 = scmp.ne.s32.totalorder %s88, %s89
    %p100 = scmp.eq.s32.totalorder %s14, 0
    %p101 = por %p99, %p100
    %p102 = scmp.ne.s32.totalorder %s88, %s89
    %p103 = scmp.eq.s32.totalorder %s15, 3
    %p104 = por %p102, %p103
    %p106 = scmp.ne.s32.totalorder %s89, %s105
    %p107 = scmp.eq.s32.totalorder %s15, 0
    %p108 = por %p106, %p107
    %s109 = ssub.s32 %s16, %s28
    %s110 = ssub.s32 %s17, %s24
    %s111 = sor.u32 %s109, %s110
    %p112 = scmp.eq.s32.totalorder %s111, 0
    %s114 = sadd.s32 %s113, 1
    %s115 = scalar_select %p112, %s113, %s114
    %p118 = pneg %p112
    %p119 = scmp.eq.s32.totalorder %s9, 3
    %p120 = por %p118, %p119
    %p121 = scmp.ne.s32.totalorder %s113, %s116
    %p122 = scmp.eq.s32.totalorder %s9, 0
    %p123 = por %p121, %p122
    %p124 = scmp.ne.s32.totalorder %s113, %s116
    %p125 = scmp.eq.s32.totalorder %s14, 3
    %p126 = por %p124, %p125
    %p127 = scmp.ne.s32.totalorder %s116, %s117
    %p128 = scmp.eq.s32.totalorder %s14, 0
    %p129 = por %p127, %p128
    %p130 = scmp.ne.s32.totalorder %s116, %s117
    %p131 = scmp.eq.s32.totalorder %s15, 3
    %p132 = por %p130, %p131
    %p134 = scmp.ne.s32.totalorder %s117, %s133
    %p135 = scmp.eq.s32.totalorder %s15, 0
    %p136 = por %p134, %p135
    %p137 = scmp.le.s32.totalorder 1, %s9
    %p138 = scmp.lt.s32.totalorder %s9, 5
    %p139 = pnand %p137, %p138
    %p140 = pneg %p139
    // Predicated region
    $region9: #{grcu_forward.3} parent=5 // pred_check
      _
    $region10: #{grcu_forward.3} parent=5 // pred_check_branch
      %142 = sbr.rel (%p139) target = $region12
    $region11: #{grcu_forward.3} parent=5 // pred_region
      %s143 = ssub.s32 %s9, 1
    $region12: #{grcu_forward.3} parent=5 // pred_fallthru
      _
    %p144 = scmp.lt.s32.totalorder %s9, 4
    // Predicated region
    $region13: #{grcu_forward.3} parent=5 // pred_check
      %p145 = pneg %p144
    $region14: #{grcu_forward.3} parent=5 // pred_check_branch
      %147 = sbr.rel (%p145) target = $region16
    $region15: #{grcu_forward.3} parent=5 // pred_region
      // Predicated region
      $region17: #{grcu_forward.3} parent=15 // pred_check
        %p148 = pneg %p43
      $region18: #{grcu_forward.3} parent=15 // pred_check_branch
        %150 = sbr.rel (%p148) target = $region20
      $region19: #{grcu_forward.3} parent=15 // pred_region
        %s151 = smul.u32 8, %s17
        %p152 = scmp.lt.s32.totalorder %s16, 3
        %s153 = scalar_select %p152, %s16, 3
        %p154 = scmp.lt.s32.totalorder %s151, 7
        %s155 = scalar_select %p154, %s151, 7
        %s156 = smul.addr %s153, 8
        %s157 = sadd.s32 %s155, %s156
        %s158 = smul.addr %s157, 4
        %s159 = scalar_lea.vmem %s0, %s158
        %s160 = smul.u32 8, %s17
      $region20: #{grcu_forward.3} parent=15 // pred_fallthru
        _
      // Predicated region
      $region21: #{grcu_forward.3} parent=15 // pred_check
        %p161 = pneg %p69
      $region22: #{grcu_forward.3} parent=15 // pred_check_branch
        %163 = sbr.rel (%p161) target = $region24
      $region23: #{grcu_forward.3} parent=15 // pred_region
        %p164 = scmp.lt.s32.totalorder %s16, 3
        %s165 = scalar_select %p164, %s16, 3
        %s166 = smul.addr %s165, 8
        %s167 = smul.addr %s166, 4
        %s168 = scalar_lea.vmem %s1, %s167
      $region24: #{grcu_forward.3} parent=15 // pred_fallthru
        _
      // Predicated region
      $region25: #{grcu_forward.3} parent=15 // pred_check
        %p169 = pneg %p95
      $region26: #{grcu_forward.3} parent=15 // pred_check_branch
        %171 = sbr.rel (%p169) target = $region28
      $region27: #{grcu_forward.3} parent=15 // pred_region
        %p172 = scmp.lt.s32.totalorder %s16, 3
        %s173 = scalar_select %p172, %s16, 3
        %s174 = smul.addr %s173, 4
        %s175 = smul.addr %s174, 4
        %s176 = scalar_lea.vmem %s2, %s175
      $region28: #{grcu_forward.3} parent=15 // pred_fallthru
        _
    $region16: #{grcu_forward.3} parent=5 // pred_fallthru
      _
    %p177 = scmp.le.s32.totalorder 1, %s9
    %p178 = scmp.lt.s32.totalorder %s9, 5
    %p179 = pnand %p177, %p178
    %p180 = pneg %p179
    // Predicated region
    $region29: #{grcu_forward.3} parent=5 // pred_check
      _
    $region30: #{grcu_forward.3} parent=5 // pred_check_branch
      %182 = sbr.rel (%p179) target = $region32
    $region31: #{grcu_forward.3} parent=5 // pred_region
      %s183 = ssub.s32 %s9, 1
      %s184 = smul.u32 8, %s19
      %p185 = scmp.lt.s32.totalorder %s18, 3
      %s186 = scalar_select %p185, %s18, 3
      %p187 = scmp.lt.s32.totalorder %s184, 7
      %s188 = scalar_select %p187, %s184, 7
      %s189 = smul.addr %s186, 8
      %s190 = sadd.s32 %s188, %s189
      %s191 = smul.addr %s190, 4
      %s192 = scalar_lea.vmem %s0, %s191
      %p193 = pneg %p49
      %p194 = pneg %p46
      %p195 = scmp.lt.s32.totalorder %s18, 3
      %s196 = scalar_select %p195, %s18, 3
      %s197 = smul.addr %s196, 8
      %s198 = smul.addr %s197, 4
      %s199 = scalar_lea.vmem %s1, %s198
      %p200 = pneg %p75
      %p201 = pneg %p72
      %p202 = scmp.lt.s32.totalorder %s18, 3
      %s203 = scalar_select %p202, %s18, 3
      %s204 = smul.addr %s203, 4
      %s205 = smul.addr %s204, 4
      %s206 = scalar_lea.vmem %s2, %s205
      %p207 = pneg %p101
      %p208 = pneg %p98
      %p209 = pneg %p129
      %p210 = pneg %p126
      %s211 = smul.u32 8, %s19
      %p212 = scmp.lt.s32.totalorder %s18, 3
      %s213 = scalar_select %p212, %s18, 3
      %p214 = scmp.lt.s32.totalorder %s211, 7
      %s215 = scalar_select %p214, %s211, 7
      %s216 = smul.addr %s213, 8
      %s217 = sadd.s32 %s215, %s216
      %s218 = smul.addr %s217, 8
      %s219 = scalar_lea.vmem %s3, %s218
      %s220 = smul.u32 8, %s19
      %p221 = scmp.lt.s32.totalorder %s18, 3
      %s222 = scalar_select %p221, %s18, 3
      %p223 = scmp.lt.s32.totalorder %s220, 7
      %s224 = scalar_select %p223, %s220, 7
      %s225 = smul.addr %s222, 8
      %s226 = sadd.s32 %s224, %s225
      %s227 = smul.addr %s226, 4
      %s228 = scalar_lea.vmem %s0, %s227
      %s229 = smul.u32 8, %s19
      %p230 = scmp.lt.s32.totalorder %s18, 3
      %s231 = scalar_select %p230, %s18, 3
      %s232 = smul.addr %s231, 8
      %s233 = smul.addr %s232, 4
      %s234 = scalar_lea.vmem %s1, %s233
      %p235 = scmp.lt.s32.totalorder %s18, 3
      %s236 = scalar_select %p235, %s18, 3
      %s237 = smul.addr %s236, 4
      %s238 = smul.addr %s237, 4
      %s239 = scalar_lea.vmem %s2, %s238
      %s240 = smul.u32 8, %s19
      %p241 = scmp.lt.s32.totalorder %s18, 3
      %s242 = scalar_select %p241, %s18, 3
      %p243 = scmp.lt.s32.totalorder %s240, 7
      %s244 = scalar_select %p243, %s240, 7
      %s245 = smul.addr %s242, 8
      %s246 = sadd.s32 %s244, %s245
      %s247 = smul.addr %s246, 8
      %s248 = scalar_lea.vmem %s3, %s247
      %s249 = smul.u32 8, %s19
      %v251 = vld [vmem:[%s228] sm:$0xf]
      %v252 = vld [vmem:[%s228 + $0x4] sm:$0xf]
      %v253 = vld [vmem:[%s228 + $0x8] sm:$0xf]
      %v254 = vld [vmem:[%s228 + $0xc] sm:$0xf]
      %v255 = vld [vmem:[%s228 + $0x10] sm:$0xf]
      %v256 = vld [vmem:[%s228 + $0x14] sm:$0xf]
      %v257 = vld [vmem:[%s228 + $0x18] sm:$0xf]
      %v258 = vld [vmem:[%s228 + $0x1c] sm:$0xf]
      %v259 = vld [vmem:[%s234] sm:$0xf]
      %v260 = vld [vmem:[%s234 + $0x4] sm:$0xf]
      %v261 = vld [vmem:[%s234 + $0x8] sm:$0xf]
      %v262 = vld [vmem:[%s234 + $0xc] sm:$0xf]
      %v263 = vld [vmem:[%s234 + $0x10] sm:$0xf]
      %v264 = vld [vmem:[%s234 + $0x14] sm:$0xf]
      %v265 = vld [vmem:[%s234 + $0x18] sm:$0xf]
      %v266 = vld [vmem:[%s234 + $0x1c] sm:$0xf]
      %v275 = vunpack.c.l.b16 %v251
      %v276 = vunpack.c.l.b16 %v252
      %v277 = vunpack.c.l.b16 %v253
      %v278 = vunpack.c.l.b16 %v254
      %v279 = vunpack.c.l.b16 %v255
      %v280 = vunpack.c.l.b16 %v256
      %v281 = vunpack.c.l.b16 %v257
      %v282 = vunpack.c.l.b16 %v258
      %v283 = vpack.c.b16 %v276, %v275
      %v284 = vpack.c.b16 %v278, %v277
      %v285 = vpack.c.b16 %v280, %v279
      %v286 = vpack.c.b16 %v282, %v281
      %v295 = vunpack.c.l.b16 %v259
      %v296 = vunpack.c.l.b16 %v260
      %v297 = vunpack.c.l.b16 %v261
      %v298 = vunpack.c.l.b16 %v262
      %v299 = vunpack.c.l.b16 %v263
      %v300 = vunpack.c.l.b16 %v264
      %v301 = vunpack.c.l.b16 %v265
      %v302 = vunpack.c.l.b16 %v266
      %v303 = vpack.c.b16 %v296, %v295
      %v304 = vpack.c.b16 %v298, %v297
      %v305 = vpack.c.b16 %v300, %v299
      %v306 = vpack.c.b16 %v302, %v301
      %vm311 = vcmask 523264
      %v313 = vsel %vm311, %v283, 0
      %v316 = vsel %vm311, %v284, 0
      %v319 = vsel %vm311, %v285, 0
      %v322 = vsel %vm311, %v286, 0
      %324 = vmatpush.bf16.msra.mxu0 0
      %325 = vmatpush.bf16.msra.mxu0 0
      %326 = vmatpush.bf16.msra.mxu0 0
      %327 = vmatpush.bf16.msra.mxu0 0
      %328 = vmatpush.bf16.msra.mxu0 %v306
      %329 = vmatpush.bf16.msra.mxu0 %v305
      %330 = vmatpush.bf16.msra.mxu0 %v304
      %331 = vmatpush.bf16.msra.mxu0 %v303
      %332 = vmatmul.bf16.gmra.mxu0 %v313
      %v333 = vpop.f32.mrf.mxu0
      %v334 = vadd.f32 0.0, %v333
      %v335 = vpop.f32.mrf.mxu0
      %v336 = vadd.f32 0.0, %v335
      %337 = vmatmul.bf16.gmra.mxu0 %v316
      %v338 = vpop.f32.mrf.mxu0
      %v339 = vadd.f32 0.0, %v338
      %v340 = vpop.f32.mrf.mxu0
      %v341 = vadd.f32 0.0, %v340
      %342 = vmatmul.bf16.gmra.mxu0 %v319
      %v343 = vpop.f32.mrf.mxu0
      %v344 = vadd.f32 0.0, %v343
      %v345 = vpop.f32.mrf.mxu0
      %v346 = vadd.f32 0.0, %v345
      %347 = vmatmul.bf16.gmra.mxu0 %v322
      %v348 = vpop.f32.mrf.mxu0
      %v349 = vadd.f32 0.0, %v348
      %v350 = vpop.f32.mrf.mxu0
      %v351 = vadd.f32 0.0, %v350
      %352 = vdwg.mxu0
      %v353 = vpack.c.bf16 %v336, %v334
      %v354 = vpack.c.bf16 %v341, %v339
      %v355 = vpack.c.bf16 %v346, %v344
      %v356 = vpack.c.bf16 %v351, %v349
      %v357 = vld [vmem:[%s239] sm:$0xf]
      %v358 = vld [vmem:[%s239 + $0x4] sm:$0xf]
      %v359 = vld [vmem:[%s239 + $0x8] sm:$0xf]
      %v360 = vld [vmem:[%s239 + $0xc] sm:$0xf]
      %v365 = vunpack.c.l.b16 %v357
      %v366 = vunpack.c.l.b16 %v358
      %v367 = vunpack.c.l.b16 %v359
      %v368 = vunpack.c.l.b16 %v360
      %v369 = vpack.c.b16 %v366, %v365
      %v370 = vpack.c.b16 %v368, %v367
      %vm373 = vcmask 261120
      %v375 = vsel %vm373, %v353, 0
      %v378 = vsel %vm373, %v354, 0
      %v381 = vsel %vm373, %v355, 0
      %v384 = vsel %vm373, %v356, 0
      %386 = vmatpush.bf16.msra.mxu0 0
      %387 = vmatpush.bf16.msra.mxu0 0
      %388 = vmatpush.bf16.msra.mxu0 0
      %389 = vmatpush.bf16.msra.mxu0 0
      %390 = vmatpush.bf16.msra.mxu0 0
      %391 = vmatpush.bf16.msra.mxu0 0
      %392 = vmatpush.bf16.msra.mxu0 %v370
      %393 = vmatpush.bf16.msra.mxu0 %v369
      %394 = vmatmul.bf16.gmra.mxu0 %v375
      %v395 = vpop.f32.mrf.mxu0
      %v396 = vadd.f32 0.0, %v395
      %v397 = vpop.f32.mrf.mxu0
      %v398 = vadd.f32 0.0, %v397
      %399 = vmatmul.bf16.gmra.mxu0 %v378
      %v400 = vpop.f32.mrf.mxu0
      %v401 = vadd.f32 0.0, %v400
      %v402 = vpop.f32.mrf.mxu0
      %v403 = vadd.f32 0.0, %v402
      %404 = vmatmul.bf16.gmra.mxu0 %v381
      %v405 = vpop.f32.mrf.mxu0
      %v406 = vadd.f32 0.0, %v405
      %v407 = vpop.f32.mrf.mxu0
      %v408 = vadd.f32 0.0, %v407
      %409 = vmatmul.bf16.gmra.mxu0 %v384
      %v410 = vpop.f32.mrf.mxu0
      %v411 = vadd.f32 0.0, %v410
      %v412 = vpop.f32.mrf.mxu0
      %v413 = vadd.f32 0.0, %v412
      %414 = vdwg.mxu0
      %v415 = vmax.f32 %v396, 0.0
      %v416 = vmax.f32 %v398, 0.0
      %v417 = vmax.f32 %v401, 0.0
      %v418 = vmax.f32 %v403, 0.0
      %v419 = vmax.f32 %v406, 0.0
      %v420 = vmax.f32 %v408, 0.0
      %v421 = vmax.f32 %v411, 0.0
      %v422 = vmax.f32 %v413, 0.0
      %423 = vst [vmem:[%s248] sm:$0xff] %v415
      %424 = vst [vmem:[%s248 + $0x8] sm:$0xff] %v416
      %425 = vst [vmem:[%s248 + $0x10] sm:$0xff] %v417
      %426 = vst [vmem:[%s248 + $0x18] sm:$0xff] %v418
      %427 = vst [vmem:[%s248 + $0x20] sm:$0xff] %v419
      %428 = vst [vmem:[%s248 + $0x28] sm:$0xff] %v420
      %429 = vst [vmem:[%s248 + $0x30] sm:$0xff] %v421
      %430 = vst [vmem:[%s248 + $0x38] sm:$0xff] %v422
      %s431 = smul.u32 8, %s19
      %p432 = scmp.lt.s32.totalorder %s18, 3
      %s433 = scalar_select %p432, %s18, 3
      %p434 = scmp.lt.s32.totalorder %s431, 7
      %s435 = scalar_select %p434, %s431, 7
      %s436 = smul.addr %s433, 8
      %s437 = sadd.s32 %s435, %s436
      %s438 = smul.addr %s437, 8
      %s439 = scalar_lea.vmem %s3, %s438
      // Predicated region
      $region33: #{grcu_forward.3} parent=31 // pred_check
        %p440 = pneg %p126
      $region34: #{grcu_forward.3} parent=31 // pred_check_branch
        %442 = sbr.rel (%p440) target = $region36
      $region35: #{grcu_forward.3} parent=31 // pred_region
        %s443 = smul.u32 8, %s19
      $region36: #{grcu_forward.3} parent=31 // pred_fallthru
        _
    $region32: #{grcu_forward.3} parent=5 // pred_fallthru
      _
    %p444 = scmp.le.s32.totalorder 2, %s9
    // Predicated region
    $region37: #{grcu_forward.3} parent=5 // pred_check
      %p445 = pneg %p444
    $region38: #{grcu_forward.3} parent=5 // pred_check_branch
      %447 = sbr.rel (%p445) target = $region40
    $region39: #{grcu_forward.3} parent=5 // pred_region
      %s448 = ssub.s32 %s9, 2
      // Predicated region
      $region41: #{grcu_forward.3} parent=39 // pred_check
        %p449 = pneg %p132
      $region42: #{grcu_forward.3} parent=39 // pred_check_branch
        %451 = sbr.rel (%p449) target = $region44
      $region43: #{grcu_forward.3} parent=39 // pred_region
        %s452 = smul.u32 8, %s21
        %p453 = scmp.lt.s32.totalorder %s20, 3
        %s454 = scalar_select %p453, %s20, 3
        %p455 = scmp.lt.s32.totalorder %s452, 7
        %s456 = scalar_select %p455, %s452, 7
        %s457 = smul.addr %s454, 8
        %s458 = sadd.s32 %s456, %s457
        %s459 = smul.addr %s458, 8
        %s460 = scalar_lea.vmem %s3, %s459
      $region44: #{grcu_forward.3} parent=39 // pred_fallthru
        _
    $region40: #{grcu_forward.3} parent=5 // pred_fallthru
      _
  $region6: #{grcu_forward.3} parent=0 // loop_footer
    %s13 = sadd.s32 1, %s9
  $region7: #{grcu_forward.3} parent=0 // loop_footer_branch
    %8 = sbr.rel target = $region3
  $region8: #{grcu_forward.3} parent=0 // loop_exit
    _

// kernel: grcu_forward.2
$region0: #{grcu_forward.2}
  #allocation0 [shape = 'u32[]', space=smem, size = 0x4, offset = 0x4, fixed_abs, tag = 'smem constant byte address 0x4 - core index']
  #allocation1 [shape = 'u32[72,128]{1,0:T(1,128)}', space=vmem, size = 0x9000, scoped, tag = 'internal scratch']
  #allocation2 [shape = 'f32[32,128]{1,0:T(8,128)}', space=vmem, size = 0x4000, scoped, tag = 'scratch operand']
  %s0 = inlined_call_operand.vmem [shape: f32[4,96,128], index: 0, kind: input, shape index: {}]
  %s1 = inlined_call_operand.vmem [shape: bf16[64,32], index: 1, kind: input, shape index: {}]
  %s2 = inlined_call_operand.vmem [shape: bf16[32,32], index: 2, kind: input, shape index: {}]
  %s3 = inlined_call_operand.vmem [shape: f32[32,128], index: 3, kind: input, shape index: {}]
  %s4 = inlined_call_operand.vmem [shape: bf16[4,32,128], index: 4, kind: output, shape index: {}]
  %s5 = sld [smem:[#allocation0]]
  $region30: #{grcu_forward.2} parent=0
    _
  %s7 = ssub.s32 1, %s5
  %s8 = scalar_select 0, %s7, %s5
  // Predicated region
  $region2: #{grcu_forward.2} parent=0 // pred_check
    _
  $region3: #{grcu_forward.2} parent=0 // pred_check_branch
    %10 = sbr.rel (0) target = $region5
  $region4: #{grcu_forward.2} parent=0 // pred_region
    _
  $region5: #{grcu_forward.2} parent=0 // pred_fallthru
    _
  // Predicated region
  $region6: #{grcu_forward.2} parent=0 // pred_check
    _
  $region7: #{grcu_forward.2} parent=0 // pred_check_branch
    %12 = sbr.rel (0) target = $region9
  $region8: #{grcu_forward.2} parent=0 // pred_region
    _
  $region9: #{grcu_forward.2} parent=0 // pred_fallthru
    _
  // Predicated region
  $region10: #{grcu_forward.2} parent=0 // pred_check
    _
  $region11: #{grcu_forward.2} parent=0 // pred_check_branch
    %14 = sbr.rel (0) target = $region13
  $region12: #{grcu_forward.2} parent=0 // pred_region
    _
  $region13: #{grcu_forward.2} parent=0 // pred_fallthru
    _
  // Predicated region
  $region14: #{grcu_forward.2} parent=0 // pred_check
    _
  $region15: #{grcu_forward.2} parent=0 // pred_check_branch
    %16 = sbr.rel (0) target = $region17
  $region16: #{grcu_forward.2} parent=0 // pred_region
    _
  $region17: #{grcu_forward.2} parent=0 // pred_fallthru
    _
  %p18 = scmp.eq.s32.totalorder 0, 0
  // Predicated region
  $region18: #{grcu_forward.2} parent=0 // pred_check
    %p19 = pneg %p18
  $region19: #{grcu_forward.2} parent=0 // pred_check_branch
    %21 = sbr.rel (%p19) target = $region21
  $region20: #{grcu_forward.2} parent=0 // pred_region
    %v22 = vld [vmem:[%s3] sm:$0xff]
    %v23 = vld [vmem:[%s3 + $0x8] sm:$0xff]
    %v24 = vld [vmem:[%s3 + $0x10] sm:$0xff]
    %v25 = vld [vmem:[%s3 + $0x18] sm:$0xff]
    %26 = vst [vmem:[#allocation2] sm:$0xff] %v22
    %27 = vst [vmem:[#allocation2 + $0x8] sm:$0xff] %v23
    %28 = vst [vmem:[#allocation2 + $0x10] sm:$0xff] %v24
    %29 = vst [vmem:[#allocation2 + $0x18] sm:$0xff] %v25
  $region21: #{grcu_forward.2} parent=0 // pred_fallthru
    _
  %v30 = vld [vmem:[%s1] sm:$0xf]
  %v31 = vld [vmem:[%s1 + $0x4] sm:$0xf]
  %v32 = vld [vmem:[%s1 + $0x8] sm:$0xf]
  %v33 = vld [vmem:[%s1 + $0xc] sm:$0xf]
  %v34 = vld [vmem:[%s1 + $0x10] sm:$0xf]
  %v35 = vld [vmem:[%s1 + $0x14] sm:$0xf]
  %v36 = vld [vmem:[%s1 + $0x18] sm:$0xf]
  %v37 = vld [vmem:[%s1 + $0x1c] sm:$0xf]
  %v38 = vld [vmem:[%s2] sm:$0xf]
  %v39 = vld [vmem:[%s2 + $0x4] sm:$0xf]
  %v40 = vld [vmem:[%s2 + $0x8] sm:$0xf]
  %v41 = vld [vmem:[%s2 + $0xc] sm:$0xf]
  %v42 = vld [vmem:[#allocation2] sm:$0xff]
  %v43 = vld [vmem:[#allocation2 + $0x8] sm:$0xff]
  %v44 = vld [vmem:[#allocation2 + $0x10] sm:$0xff]
  %v45 = vld [vmem:[#allocation2 + $0x18] sm:$0xff]
  %v46 = vld [vmem:[%s0] sm:$0xff]
  %v47 = vld [vmem:[%s0 + $0x8] sm:$0xff]
  %v48 = vld [vmem:[%s0 + $0x10] sm:$0xff]
  %v49 = vld [vmem:[%s0 + $0x18] sm:$0xff]
  %v50 = vld [vmem:[%s0 + $0x20] sm:$0xff]
  %v51 = vld [vmem:[%s0 + $0x28] sm:$0xff]
  %v52 = vld [vmem:[%s0 + $0x30] sm:$0xff]
  %v53 = vld [vmem:[%s0 + $0x38] sm:$0xff]
  %v54 = vld [vmem:[%s0 + $0x40] sm:$0xff]
  %v55 = vld [vmem:[%s0 + $0x48] sm:$0xff]
  %v56 = vld [vmem:[%s0 + $0x50] sm:$0xff]
  %v57 = vld [vmem:[%s0 + $0x58] sm:$0xff]
  %v58 = vpack.c.bf16 %v43, %v42
  %v59 = vpack.c.bf16 %v45, %v44
  %v68 = vunpack.c.l.b16 %v30
  %v69 = vunpack.c.l.b16 %v31
  %v70 = vunpack.c.l.b16 %v32
  %v71 = vunpack.c.l.b16 %v33
  %v72 = vunpack.c.l.b16 %v34
  %v73 = vunpack.c.l.b16 %v35
  %v74 = vunpack.c.l.b16 %v36
  %v75 = vunpack.c.l.b16 %v37
  %v76 = vpack.c.b16 %v69, %v68
  %v77 = vpack.c.b16 %v71, %v70
  %v78 = vpack.c.b16 %v73, %v72
  %v79 = vpack.c.b16 %v75, %v74
  %vm80 = vcmask 261120
  %v82 = vsel %vm80, %v76, 0
  %v85 = vsel %vm80, %v77, 0
  %v88 = vsel %vm80, %v78, 0
  %v91 = vsel %vm80, %v79, 0
  %93 = vmatpush.bf16.msra.mxu0 0
  %94 = vmatpush.bf16.msra.mxu0 0
  %95 = vmatpush.bf16.msra.mxu0 0
  %96 = vmatpush.bf16.msra.mxu0 0
  %97 = vmatpush.bf16.msra.mxu0 0
  %98 = vmatpush.bf16.msra.mxu0 0
  %99 = vmatpush.bf16.msra.mxu0 %v59
  %100 = vmatpush.bf16.msra.mxu0 %v58
  %101 = vmatmul.bf16.gmra.mxu0 %v82
  %v102 = vpop.f32.mrf.mxu0
  %v103 = vadd.f32 0.0, %v102
  %v104 = vpop.f32.mrf.mxu0
  %v105 = vadd.f32 0.0, %v104
  %106 = vmatmul.bf16.gmra.mxu0 %v85
  %v107 = vpop.f32.mrf.mxu0
  %v108 = vadd.f32 0.0, %v107
  %v109 = vpop.f32.mrf.mxu0
  %v110 = vadd.f32 0.0, %v109
  %111 = vmatmul.bf16.gmra.mxu0 %v88
  %v112 = vpop.f32.mrf.mxu0
  %v113 = vadd.f32 0.0, %v112
  %v114 = vpop.f32.mrf.mxu0
  %v115 = vadd.f32 0.0, %v114
  %116 = vmatmul.bf16.gmra.mxu0 %v91
  %v117 = vpop.f32.mrf.mxu0
  %v118 = vadd.f32 0.0, %v117
  %v119 = vpop.f32.mrf.mxu0
  %v120 = vadd.f32 0.0, %v119
  %121 = vdwg.mxu0
  %v122 = vadd.f32 %v46, %v103
  %v123 = vadd.f32 %v47, %v105
  %v124 = vadd.f32 %v48, %v108
  %v125 = vadd.f32 %v49, %v110
  %v126 = vxor.u32 %v122, 2147483648
  %v127 = vxor.u32 %v123, 2147483648
  %v128 = vxor.u32 %v124, 2147483648
  %v129 = vxor.u32 %v125, 2147483648
  %v130 = vmul.f32 %v126, 1.442695
  %v131 = vpow.pop %v130
  %v132 = vmul.f32 %v127, 1.442695
  %v133 = vpow.pop %v132
  %v134 = vmul.f32 %v128, 1.442695
  %v135 = vpow.pop %v134
  %v136 = vmul.f32 %v129, 1.442695
  %v137 = vpow.pop %v136
  %v138 = vadd.f32 %v131, 1.0
  %v139 = vadd.f32 %v133, 1.0
  %v140 = vadd.f32 %v135, 1.0
  %v141 = vadd.f32 %v137, 1.0
  %v142 = vrcp.pop %v138
  %v143 = vmul.f32 %v138, %v142
  %v144 = vsub.f32 1.0, %v143
  %v145 = vmul.f32 %v142, %v144
  %v146 = vadd.f32 %v142, %v145
  %vm147 = vweird.f32 %v138
  %vm148 = vweird.f32 %v142
  %vm149 = vmor %vm147, %vm148
  %v150 = vsel %vm149, %v142, %v146
  %v151 = vand.u32 2147483647, %v138
  %vm152 = vcmp.eq.f32.partialorder %v151, 8.507059e+37
  %v153 = vand.u32 %v138, 2147483648
  %v154 = vor.u32 1.1754944e-38, %v153
  %v155 = vsel %vm152, %v154, %v150
  %v156 = vmul.f32 1.0, %v155
  %v157 = vrcp.pop %v139
  %v158 = vmul.f32 %v139, %v157
  %v159 = vsub.f32 1.0, %v158
  %v160 = vmul.f32 %v157, %v159
  %v161 = vadd.f32 %v157, %v160
  %vm162 = vweird.f32 %v139
  %vm163 = vweird.f32 %v157
  %vm164 = vmor %vm162, %vm163
  %v165 = vsel %vm164, %v157, %v161
  %v166 = vand.u32 2147483647, %v139
  %vm167 = vcmp.eq.f32.partialorder %v166, 8.507059e+37
  %v168 = vand.u32 %v139, 2147483648
  %v169 = vor.u32 1.1754944e-38, %v168
  %v170 = vsel %vm167, %v169, %v165
  %v171 = vmul.f32 1.0, %v170
  %v172 = vrcp.pop %v140
  %v173 = vmul.f32 %v140, %v172
  %v174 = vsub.f32 1.0, %v173
  %v175 = vmul.f32 %v172, %v174
  %v176 = vadd.f32 %v172, %v175
  %vm177 = vweird.f32 %v140
  %vm178 = vweird.f32 %v172
  %vm179 = vmor %vm177, %vm178
  %v180 = vsel %vm179, %v172, %v176
  %v181 = vand.u32 2147483647, %v140
  %vm182 = vcmp.eq.f32.partialorder %v181, 8.507059e+37
  %v183 = vand.u32 %v140, 2147483648
  %v184 = vor.u32 1.1754944e-38, %v183
  %v185 = vsel %vm182, %v184, %v180
  %v186 = vmul.f32 1.0, %v185
  %v187 = vrcp.pop %v141
  %v188 = vmul.f32 %v141, %v187
  %v189 = vsub.f32 1.0, %v188
  %v190 = vmul.f32 %v187, %v189
  %v191 = vadd.f32 %v187, %v190
  %vm192 = vweird.f32 %v141
  %vm193 = vweird.f32 %v187
  %vm194 = vmor %vm192, %vm193
  %v195 = vsel %vm194, %v187, %v191
  %v196 = vand.u32 2147483647, %v141
  %vm197 = vcmp.eq.f32.partialorder %v196, 8.507059e+37
  %v198 = vand.u32 %v141, 2147483648
  %v199 = vor.u32 1.1754944e-38, %v198
  %v200 = vsel %vm197, %v199, %v195
  %v201 = vmul.f32 1.0, %v200
  %v202 = vadd.f32 %v50, %v113
  %v203 = vadd.f32 %v51, %v115
  %v204 = vadd.f32 %v52, %v118
  %v205 = vadd.f32 %v53, %v120
  %v206 = vxor.u32 %v202, 2147483648
  %v207 = vxor.u32 %v203, 2147483648
  %v208 = vxor.u32 %v204, 2147483648
  %v209 = vxor.u32 %v205, 2147483648
  %v210 = vmul.f32 %v206, 1.442695
  %v211 = vpow.pop %v210
  %v212 = vmul.f32 %v207, 1.442695
  %v213 = vpow.pop %v212
  %v214 = vmul.f32 %v208, 1.442695
  %v215 = vpow.pop %v214
  %v216 = vmul.f32 %v209, 1.442695
  %v217 = vpow.pop %v216
  %v218 = vadd.f32 %v211, 1.0
  %v219 = vadd.f32 %v213, 1.0
  %v220 = vadd.f32 %v215, 1.0
  %v221 = vadd.f32 %v217, 1.0
  %v222 = vrcp.pop %v218
  %v223 = vmul.f32 %v218, %v222
  %v224 = vsub.f32 1.0, %v223
  %v225 = vmul.f32 %v222, %v224
  %v226 = vadd.f32 %v222, %v225
  %vm227 = vweird.f32 %v218
  %vm228 = vweird.f32 %v222
  %vm229 = vmor %vm227, %vm228
  %v230 = vsel %vm229, %v222, %v226
  %v231 = vand.u32 2147483647, %v218
  %vm232 = vcmp.eq.f32.partialorder %v231, 8.507059e+37
  %v233 = vand.u32 %v218, 2147483648
  %v234 = vor.u32 1.1754944e-38, %v233
  %v235 = vsel %vm232, %v234, %v230
  %v236 = vmul.f32 1.0, %v235
  %v237 = vrcp.pop %v219
  %v238 = vmul.f32 %v219, %v237
  %v239 = vsub.f32 1.0, %v238
  %v240 = vmul.f32 %v237, %v239
  %v241 = vadd.f32 %v237, %v240
  %vm242 = vweird.f32 %v219
  %vm243 = vweird.f32 %v237
  %vm244 = vmor %vm242, %vm243
  %v245 = vsel %vm244, %v237, %v241
  %v246 = vand.u32 2147483647, %v219
  %vm247 = vcmp.eq.f32.partialorder %v246, 8.507059e+37
  %v248 = vand.u32 %v219, 2147483648
  %v249 = vor.u32 1.1754944e-38, %v248
  %v250 = vsel %vm247, %v249, %v245
  %v251 = vmul.f32 1.0, %v250
  %v252 = vrcp.pop %v220
  %v253 = vmul.f32 %v220, %v252
  %v254 = vsub.f32 1.0, %v253
  %v255 = vmul.f32 %v252, %v254
  %v256 = vadd.f32 %v252, %v255
  %vm257 = vweird.f32 %v220
  %vm258 = vweird.f32 %v252
  %vm259 = vmor %vm257, %vm258
  %v260 = vsel %vm259, %v252, %v256
  %v261 = vand.u32 2147483647, %v220
  %vm262 = vcmp.eq.f32.partialorder %v261, 8.507059e+37
  %v263 = vand.u32 %v220, 2147483648
  %v264 = vor.u32 1.1754944e-38, %v263
  %v265 = vsel %vm262, %v264, %v260
  %v266 = vmul.f32 1.0, %v265
  %v267 = vrcp.pop %v221
  %v268 = vmul.f32 %v221, %v267
  %v269 = vsub.f32 1.0, %v268
  %v270 = vmul.f32 %v267, %v269
  %v271 = vadd.f32 %v267, %v270
  %vm272 = vweird.f32 %v221
  %vm273 = vweird.f32 %v267
  %vm274 = vmor %vm272, %vm273
  %v275 = vsel %vm274, %v267, %v271
  %v276 = vand.u32 2147483647, %v221
  %vm277 = vcmp.eq.f32.partialorder %v276, 8.507059e+37
  %v278 = vand.u32 %v221, 2147483648
  %v279 = vor.u32 1.1754944e-38, %v278
  %v280 = vsel %vm277, %v279, %v275
  %v281 = vmul.f32 1.0, %v280
  %v282 = vmul.f32 %v236, %v42
  %v283 = vmul.f32 %v251, %v43
  %v284 = vmul.f32 %v266, %v44
  %v285 = vmul.f32 %v281, %v45
  %v286 = vpack.c.bf16 %v283, %v282
  %v287 = vpack.c.bf16 %v285, %v284
  %v292 = vunpack.c.l.b16 %v38
  %v293 = vunpack.c.l.b16 %v39
  %v294 = vunpack.c.l.b16 %v40
  %v295 = vunpack.c.l.b16 %v41
  %v296 = vpack.c.b16 %v293, %v292
  %v297 = vpack.c.b16 %v295, %v294
  %v299 = vsel %vm80, %v296, 0
  %v302 = vsel %vm80, %v297, 0
  %304 = vmatpush.bf16.msra.mxu0 0
  %305 = vmatpush.bf16.msra.mxu0 0
  %306 = vmatpush.bf16.msra.mxu0 0
  %307 = vmatpush.bf16.msra.mxu0 0
  %308 = vmatpush.bf16.msra.mxu0 0
  %309 = vmatpush.bf16.msra.mxu0 0
  %310 = vmatpush.bf16.msra.mxu0 %v287
  %311 = vmatpush.bf16.msra.mxu0 %v286
  %312 = vmatmul.bf16.gmra.mxu0 %v299
  %v313 = vpop.f32.mrf.mxu0
  %v314 = vadd.f32 0.0, %v313
  %v315 = vpop.f32.mrf.mxu0
  %v316 = vadd.f32 0.0, %v315
  %317 = vmatmul.bf16.gmra.mxu0 %v302
  %v318 = vpop.f32.mrf.mxu0
  %v319 = vadd.f32 0.0, %v318
  %v320 = vpop.f32.mrf.mxu0
  %v321 = vadd.f32 0.0, %v320
  %322 = vdwg.mxu0
  %v323 = vadd.f32 %v54, %v314
  %v324 = vadd.f32 %v55, %v316
  %v325 = vadd.f32 %v56, %v319
  %v326 = vadd.f32 %v57, %v321
  %v327 = vtanh.pop %v323
  %v328 = vtanh.pop %v324
  %v329 = vtanh.pop %v325
  %v330 = vtanh.pop %v326
  %v331 = vsub.f32 1.0, %v156
  %v332 = vsub.f32 1.0, %v171
  %v333 = vsub.f32 1.0, %v186
  %v334 = vsub.f32 1.0, %v201
  %v335 = vmul.f32 %v331, %v42
  %v336 = vmul.f32 %v332, %v43
  %v337 = vmul.f32 %v333, %v44
  %v338 = vmul.f32 %v334, %v45
  %v339 = vmul.f32 %v156, %v327
  %v340 = vmul.f32 %v171, %v328
  %v341 = vmul.f32 %v186, %v329
  %v342 = vmul.f32 %v201, %v330
  %v343 = vadd.f32 %v335, %v339
  %v344 = vadd.f32 %v336, %v340
  %v345 = vadd.f32 %v337, %v341
  %v346 = vadd.f32 %v338, %v342
  %v347 = vpack.c.bf16 %v343, %v343
  %v348 = vpack.c.bf16 %v344, %v344
  %v349 = vpack.c.bf16 %v345, %v345
  %v350 = vpack.c.bf16 %v346, %v346
  %351 = vst [vmem:[%s4] sm:$0xf] %v347
  %352 = vst [vmem:[%s4 + $0x4] sm:$0xf] %v348
  %353 = vst [vmem:[%s4 + $0x8] sm:$0xf] %v349
  %354 = vst [vmem:[%s4 + $0xc] sm:$0xf] %v350
  %s355 = scalar_lea.vmem %s0, 96
  %v356 = vld [vmem:[%s355] sm:$0xff]
  %v357 = vld [vmem:[%s355 + $0x8] sm:$0xff]
  %v358 = vld [vmem:[%s355 + $0x10] sm:$0xff]
  %v359 = vld [vmem:[%s355 + $0x18] sm:$0xff]
  %v360 = vld [vmem:[%s355 + $0x20] sm:$0xff]
  %v361 = vld [vmem:[%s355 + $0x28] sm:$0xff]
  %v362 = vld [vmem:[%s355 + $0x30] sm:$0xff]
  %v363 = vld [vmem:[%s355 + $0x38] sm:$0xff]
  %v364 = vld [vmem:[%s355 + $0x40] sm:$0xff]
  %v365 = vld [vmem:[%s355 + $0x48] sm:$0xff]
  %v366 = vld [vmem:[%s355 + $0x50] sm:$0xff]
  %v367 = vld [vmem:[%s355 + $0x58] sm:$0xff]
  %v372 = vunpack.c.l.b16 %v347
  %v373 = vunpack.c.l.b16 %v348
  %v374 = vunpack.c.l.b16 %v349
  %v375 = vunpack.c.l.b16 %v350
  %v376 = vpack.c.b16 %v373, %v372
  %v377 = vpack.c.b16 %v375, %v374
  %380 = vmatpush.bf16.msra.mxu0 0
  %381 = vmatpush.bf16.msra.mxu0 0
  %382 = vmatpush.bf16.msra.mxu0 0
  %383 = vmatpush.bf16.msra.mxu0 0
  %384 = vmatpush.bf16.msra.mxu0 0
  %385 = vmatpush.bf16.msra.mxu0 0
  %386 = vmatpush.bf16.msra.mxu0 %v377
  %387 = vmatpush.bf16.msra.mxu0 %v376
  %388 = vmatmul.bf16.gmra.mxu0 %v82
  %v389 = vpop.f32.mrf.mxu0
  %v390 = vadd.f32 0.0, %v389
  %v391 = vpop.f32.mrf.mxu0
  %v392 = vadd.f32 0.0, %v391
  %393 = vmatmul.bf16.gmra.mxu0 %v85
  %v394 = vpop.f32.mrf.mxu0
  %v395 = vadd.f32 0.0, %v394
  %v396 = vpop.f32.mrf.mxu0
  %v397 = vadd.f32 0.0, %v396
  %398 = vmatmul.bf16.gmra.mxu0 %v88
  %v399 = vpop.f32.mrf.mxu0
  %v400 = vadd.f32 0.0, %v399
  %v401 = vpop.f32.mrf.mxu0
  %v402 = vadd.f32 0.0, %v401
  %403 = vmatmul.bf16.gmra.mxu0 %v91
  %v404 = vpop.f32.mrf.mxu0
  %v405 = vadd.f32 0.0, %v404
  %v406 = vpop.f32.mrf.mxu0
  %v407 = vadd.f32 0.0, %v406
  %408 = vdwg.mxu0
  %v409 = vadd.f32 %v356, %v390
  %v410 = vadd.f32 %v357, %v392
  %v411 = vadd.f32 %v358, %v395
  %v412 = vadd.f32 %v359, %v397
  %v413 = vxor.u32 %v409, 2147483648
  %v414 = vxor.u32 %v410, 2147483648
  %v415 = vxor.u32 %v411, 2147483648
  %v416 = vxor.u32 %v412, 2147483648
  %v417 = vmul.f32 %v413, 1.442695
  %v418 = vpow.pop %v417
  %v419 = vmul.f32 %v414, 1.442695
  %v420 = vpow.pop %v419
  %v421 = vmul.f32 %v415, 1.442695
  %v422 = vpow.pop %v421
  %v423 = vmul.f32 %v416, 1.442695
  %v424 = vpow.pop %v423
  %v425 = vadd.f32 %v418, 1.0
  %v426 = vadd.f32 %v420, 1.0
  %v427 = vadd.f32 %v422, 1.0
  %v428 = vadd.f32 %v424, 1.0
  %v429 = vrcp.pop %v425
  %v430 = vmul.f32 %v425, %v429
  %v431 = vsub.f32 1.0, %v430
  %v432 = vmul.f32 %v429, %v431
  %v433 = vadd.f32 %v429, %v432
  %vm434 = vweird.f32 %v425
  %vm435 = vweird.f32 %v429
  %vm436 = vmor %vm434, %vm435
  %v437 = vsel %vm436, %v429, %v433
  %v438 = vand.u32 2147483647, %v425
  %vm439 = vcmp.eq.f32.partialorder %v438, 8.507059e+37
  %v440 = vand.u32 %v425, 2147483648
  %v441 = vor.u32 1.1754944e-38, %v440
  %v442 = vsel %vm439, %v441, %v437
  %v443 = vmul.f32 1.0, %v442
  %v444 = vrcp.pop %v426
  %v445 = vmul.f32 %v426, %v444
  %v446 = vsub.f32 1.0, %v445
  %v447 = vmul.f32 %v444, %v446
  %v448 = vadd.f32 %v444, %v447
  %vm449 = vweird.f32 %v426
  %vm450 = vweird.f32 %v444
  %vm451 = vmor %vm449, %vm450
  %v452 = vsel %vm451, %v444, %v448
  %v453 = vand.u32 2147483647, %v426
  %vm454 = vcmp.eq.f32.partialorder %v453, 8.507059e+37
  %v455 = vand.u32 %v426, 2147483648
  %v456 = vor.u32 1.1754944e-38, %v455
  %v457 = vsel %vm454, %v456, %v452
  %v458 = vmul.f32 1.0, %v457
  %v459 = vrcp.pop %v427
  %v460 = vmul.f32 %v427, %v459
  %v461 = vsub.f32 1.0, %v460
  %v462 = vmul.f32 %v459, %v461
  %v463 = vadd.f32 %v459, %v462
  %vm464 = vweird.f32 %v427
  %vm465 = vweird.f32 %v459
  %vm466 = vmor %vm464, %vm465
  %v467 = vsel %vm466, %v459, %v463
  %v468 = vand.u32 2147483647, %v427
  %vm469 = vcmp.eq.f32.partialorder %v468, 8.507059e+37
  %v470 = vand.u32 %v427, 2147483648
  %v471 = vor.u32 1.1754944e-38, %v470
  %v472 = vsel %vm469, %v471, %v467
  %v473 = vmul.f32 1.0, %v472
  %v474 = vrcp.pop %v428
  %v475 = vmul.f32 %v428, %v474
  %v476 = vsub.f32 1.0, %v475
  %v477 = vmul.f32 %v474, %v476
  %v478 = vadd.f32 %v474, %v477
  %vm479 = vweird.f32 %v428
  %vm480 = vweird.f32 %v474
  %vm481 = vmor %vm479, %vm480
  %v482 = vsel %vm481, %v474, %v478
  %v483 = vand.u32 2147483647, %v428
  %vm484 = vcmp.eq.f32.partialorder %v483, 8.507059e+37
  %v485 = vand.u32 %v428, 2147483648
  %v486 = vor.u32 1.1754944e-38, %v485
  %v487 = vsel %vm484, %v486, %v482
  %v488 = vmul.f32 1.0, %v487
  %v489 = vadd.f32 %v360, %v400
  %v490 = vadd.f32 %v361, %v402
  %v491 = vadd.f32 %v362, %v405
  %v492 = vadd.f32 %v363, %v407
  %v493 = vxor.u32 %v489, 2147483648
  %v494 = vxor.u32 %v490, 2147483648
  %v495 = vxor.u32 %v491, 2147483648
  %v496 = vxor.u32 %v492, 2147483648
  %v497 = vmul.f32 %v493, 1.442695
  %v498 = vpow.pop %v497
  %v499 = vmul.f32 %v494, 1.442695
  %v500 = vpow.pop %v499
  %v501 = vmul.f32 %v495, 1.442695
  %v502 = vpow.pop %v501
  %v503 = vmul.f32 %v496, 1.442695
  %v504 = vpow.pop %v503
  %v505 = vadd.f32 %v498, 1.0
  %v506 = vadd.f32 %v500, 1.0
  %v507 = vadd.f32 %v502, 1.0
  %v508 = vadd.f32 %v504, 1.0
  %v509 = vrcp.pop %v505
  %v510 = vmul.f32 %v505, %v509
  %v511 = vsub.f32 1.0, %v510
  %v512 = vmul.f32 %v509, %v511
  %v513 = vadd.f32 %v509, %v512
  %vm514 = vweird.f32 %v505
  %vm515 = vweird.f32 %v509
  %vm516 = vmor %vm514, %vm515
  %v517 = vsel %vm516, %v509, %v513
  %v518 = vand.u32 2147483647, %v505
  %vm519 = vcmp.eq.f32.partialorder %v518, 8.507059e+37
  %v520 = vand.u32 %v505, 2147483648
  %v521 = vor.u32 1.1754944e-38, %v520
  %v522 = vsel %vm519, %v521, %v517
  %v523 = vmul.f32 1.0, %v522
  %v524 = vrcp.pop %v506
  %v525 = vmul.f32 %v506, %v524
  %v526 = vsub.f32 1.0, %v525
  %v527 = vmul.f32 %v524, %v526
  %v528 = vadd.f32 %v524, %v527
  %vm529 = vweird.f32 %v506
  %vm530 = vweird.f32 %v524
  %vm531 = vmor %vm529, %vm530
  %v532 = vsel %vm531, %v524, %v528
  %v533 = vand.u32 2147483647, %v506
  %vm534 = vcmp.eq.f32.partialorder %v533, 8.507059e+37
  %v535 = vand.u32 %v506, 2147483648
  %v536 = vor.u32 1.1754944e-38, %v535
  %v537 = vsel %vm534, %v536, %v532
  %v538 = vmul.f32 1.0, %v537
  %v539 = vrcp.pop %v507
  %v540 = vmul.f32 %v507, %v539
  %v541 = vsub.f32 1.0, %v540
  %v542 = vmul.f32 %v539, %v541
  %v543 = vadd.f32 %v539, %v542
  %vm544 = vweird.f32 %v507
  %vm545 = vweird.f32 %v539
  %vm546 = vmor %vm544, %vm545
  %v547 = vsel %vm546, %v539, %v543
  %v548 = vand.u32 2147483647, %v507
  %vm549 = vcmp.eq.f32.partialorder %v548, 8.507059e+37
  %v550 = vand.u32 %v507, 2147483648
  %v551 = vor.u32 1.1754944e-38, %v550
  %v552 = vsel %vm549, %v551, %v547
  %v553 = vmul.f32 1.0, %v552
  %v554 = vrcp.pop %v508
  %v555 = vmul.f32 %v508, %v554
  %v556 = vsub.f32 1.0, %v555
  %v557 = vmul.f32 %v554, %v556
  %v558 = vadd.f32 %v554, %v557
  %vm559 = vweird.f32 %v508
  %vm560 = vweird.f32 %v554
  %vm561 = vmor %vm559, %vm560
  %v562 = vsel %vm561, %v554, %v558
  %v563 = vand.u32 2147483647, %v508
  %vm564 = vcmp.eq.f32.partialorder %v563, 8.507059e+37
  %v565 = vand.u32 %v508, 2147483648
  %v566 = vor.u32 1.1754944e-38, %v565
  %v567 = vsel %vm564, %v566, %v562
  %v568 = vmul.f32 1.0, %v567
  %v569 = vmul.f32 %v523, %v343
  %v570 = vmul.f32 %v538, %v344
  %v571 = vmul.f32 %v553, %v345
  %v572 = vmul.f32 %v568, %v346
  %v573 = vpack.c.bf16 %v570, %v569
  %v574 = vpack.c.bf16 %v572, %v571
  %575 = vmatpush.bf16.msra.mxu0 0
  %576 = vmatpush.bf16.msra.mxu0 0
  %577 = vmatpush.bf16.msra.mxu0 0
  %578 = vmatpush.bf16.msra.mxu0 0
  %579 = vmatpush.bf16.msra.mxu0 0
  %580 = vmatpush.bf16.msra.mxu0 0
  %581 = vmatpush.bf16.msra.mxu0 %v574
  %582 = vmatpush.bf16.msra.mxu0 %v573
  %583 = vmatmul.bf16.gmra.mxu0 %v299
  %v584 = vpop.f32.mrf.mxu0
  %v585 = vadd.f32 0.0, %v584
  %v586 = vpop.f32.mrf.mxu0
  %v587 = vadd.f32 0.0, %v586
  %588 = vmatmul.bf16.gmra.mxu0 %v302
  %v589 = vpop.f32.mrf.mxu0
  %v590 = vadd.f32 0.0, %v589
  %v591 = vpop.f32.mrf.mxu0
  %v592 = vadd.f32 0.0, %v591
  %593 = vdwg.mxu0
  %v594 = vadd.f32 %v364, %v585
  %v595 = vadd.f32 %v365, %v587
  %v596 = vadd.f32 %v366, %v590
  %v597 = vadd.f32 %v367, %v592
  %v598 = vtanh.pop %v594
  %v599 = vtanh.pop %v595
  %v600 = vtanh.pop %v596
  %v601 = vtanh.pop %v597
  %v602 = vsub.f32 1.0, %v443
  %v603 = vsub.f32 1.0, %v458
  %v604 = vsub.f32 1.0, %v473
  %v605 = vsub.f32 1.0, %v488
  %v606 = vmul.f32 %v602, %v343
  %v607 = vmul.f32 %v603, %v344
  %v608 = vmul.f32 %v604, %v345
  %v609 = vmul.f32 %v605, %v346
  %v610 = vmul.f32 %v443, %v598
  %v611 = vmul.f32 %v458, %v599
  %v612 = vmul.f32 %v473, %v600
  %v613 = vmul.f32 %v488, %v601
  %v614 = vadd.f32 %v606, %v610
  %v615 = vadd.f32 %v607, %v611
  %v616 = vadd.f32 %v608, %v612
  %v617 = vadd.f32 %v609, %v613
  %v618 = vpack.c.bf16 %v614, %v614
  %v619 = vpack.c.bf16 %v615, %v615
  %v620 = vpack.c.bf16 %v616, %v616
  %v621 = vpack.c.bf16 %v617, %v617
  %s622 = scalar_lea.vmem %s4, 16
  %623 = vst [vmem:[%s622] sm:$0xf] %v618
  %624 = vst [vmem:[%s622 + $0x4] sm:$0xf] %v619
  %625 = vst [vmem:[%s622 + $0x8] sm:$0xf] %v620
  %626 = vst [vmem:[%s622 + $0xc] sm:$0xf] %v621
  %s627 = scalar_lea.vmem %s0, 192
  %v628 = vld [vmem:[%s627] sm:$0xff]
  %v629 = vld [vmem:[%s627 + $0x8] sm:$0xff]
  %v630 = vld [vmem:[%s627 + $0x10] sm:$0xff]
  %v631 = vld [vmem:[%s627 + $0x18] sm:$0xff]
  %v632 = vld [vmem:[%s627 + $0x20] sm:$0xff]
  %v633 = vld [vmem:[%s627 + $0x28] sm:$0xff]
  %v634 = vld [vmem:[%s627 + $0x30] sm:$0xff]
  %v635 = vld [vmem:[%s627 + $0x38] sm:$0xff]
  %v636 = vld [vmem:[%s627 + $0x40] sm:$0xff]
  %v637 = vld [vmem:[%s627 + $0x48] sm:$0xff]
  %v638 = vld [vmem:[%s627 + $0x50] sm:$0xff]
  %v639 = vld [vmem:[%s627 + $0x58] sm:$0xff]
  %v644 = vunpack.c.l.b16 %v618
  %v645 = vunpack.c.l.b16 %v619
  %v646 = vunpack.c.l.b16 %v620
  %v647 = vunpack.c.l.b16 %v621
  %v648 = vpack.c.b16 %v645, %v644
  %v649 = vpack.c.b16 %v647, %v646
  %652 = vmatpush.bf16.msra.mxu0 0
  %653 = vmatpush.bf16.msra.mxu0 0
  %654 = vmatpush.bf16.msra.mxu0 0
  %655 = vmatpush.bf16.msra.mxu0 0
  %656 = vmatpush.bf16.msra.mxu0 0
  %657 = vmatpush.bf16.msra.mxu0 0
  %658 = vmatpush.bf16.msra.mxu0 %v649
  %659 = vmatpush.bf16.msra.mxu0 %v648
  %660 = vmatmul.bf16.gmra.mxu0 %v82
  %v661 = vpop.f32.mrf.mxu0
  %v662 = vadd.f32 0.0, %v661
  %v663 = vpop.f32.mrf.mxu0
  %v664 = vadd.f32 0.0, %v663
  %665 = vmatmul.bf16.gmra.mxu0 %v85
  %v666 = vpop.f32.mrf.mxu0
  %v667 = vadd.f32 0.0, %v666
  %v668 = vpop.f32.mrf.mxu0
  %v669 = vadd.f32 0.0, %v668
  %670 = vmatmul.bf16.gmra.mxu0 %v88
  %v671 = vpop.f32.mrf.mxu0
  %v672 = vadd.f32 0.0, %v671
  %v673 = vpop.f32.mrf.mxu0
  %v674 = vadd.f32 0.0, %v673
  %675 = vmatmul.bf16.gmra.mxu0 %v91
  %v676 = vpop.f32.mrf.mxu0
  %v677 = vadd.f32 0.0, %v676
  %v678 = vpop.f32.mrf.mxu0
  %v679 = vadd.f32 0.0, %v678
  %680 = vdwg.mxu0
  %v681 = vadd.f32 %v628, %v662
  %v682 = vadd.f32 %v629, %v664
  %v683 = vadd.f32 %v630, %v667
  %v684 = vadd.f32 %v631, %v669
  %v685 = vxor.u32 %v681, 2147483648
  %v686 = vxor.u32 %v682, 2147483648
  %v687 = vxor.u32 %v683, 2147483648
  %v688 = vxor.u32 %v684, 2147483648
  %v689 = vmul.f32 %v685, 1.442695
  %v690 = vpow.pop %v689
  %v691 = vmul.f32 %v686, 1.442695
  %v692 = vpow.pop %v691
  %v693 = vmul.f32 %v687, 1.442695
  %v694 = vpow.pop %v693
  %v695 = vmul.f32 %v688, 1.442695
  %v696 = vpow.pop %v695
  %v697 = vadd.f32 %v690, 1.0
  %v698 = vadd.f32 %v692, 1.0
  %v699 = vadd.f32 %v694, 1.0
  %v700 = vadd.f32 %v696, 1.0
  %v701 = vrcp.pop %v697
  %v702 = vmul.f32 %v697, %v701
  %v703 = vsub.f32 1.0, %v702
  %v704 = vmul.f32 %v701, %v703
  %v705 = vadd.f32 %v701, %v704
  %vm706 = vweird.f32 %v697
  %vm707 = vweird.f32 %v701
  %vm708 = vmor %vm706, %vm707
  %v709 = vsel %vm708, %v701, %v705
  %v710 = vand.u32 2147483647, %v697
  %vm711 = vcmp.eq.f32.partialorder %v710, 8.507059e+37
  %v712 = vand.u32 %v697, 2147483648
  %v713 = vor.u32 1.1754944e-38, %v712
  %v714 = vsel %vm711, %v713, %v709
  %v715 = vmul.f32 1.0, %v714
  %v716 = vrcp.pop %v698
  %v717 = vmul.f32 %v698, %v716
  %v718 = vsub.f32 1.0, %v717
  %v719 = vmul.f32 %v716, %v718
  %v720 = vadd.f32 %v716, %v719
  %vm721 = vweird.f32 %v698
  %vm722 = vweird.f32 %v716
  %vm723 = vmor %vm721, %vm722
  %v724 = vsel %vm723, %v716, %v720
  %v725 = vand.u32 2147483647, %v698
  %vm726 = vcmp.eq.f32.partialorder %v725, 8.507059e+37
  %v727 = vand.u32 %v698, 2147483648
  %v728 = vor.u32 1.1754944e-38, %v727
  %v729 = vsel %vm726, %v728, %v724
  %v730 = vmul.f32 1.0, %v729
  %v731 = vrcp.pop %v699
  %v732 = vmul.f32 %v699, %v731
  %v733 = vsub.f32 1.0, %v732
  %v734 = vmul.f32 %v731, %v733
  %v735 = vadd.f32 %v731, %v734
  %vm736 = vweird.f32 %v699
  %vm737 = vweird.f32 %v731
  %vm738 = vmor %vm736, %vm737
  %v739 = vsel %vm738, %v731, %v735
  %v740 = vand.u32 2147483647, %v699
  %vm741 = vcmp.eq.f32.partialorder %v740, 8.507059e+37
  %v742 = vand.u32 %v699, 2147483648
  %v743 = vor.u32 1.1754944e-38, %v742
  %v744 = vsel %vm741, %v743, %v739
  %v745 = vmul.f32 1.0, %v744
  %v746 = vrcp.pop %v700
  %v747 = vmul.f32 %v700, %v746
  %v748 = vsub.f32 1.0, %v747
  %v749 = vmul.f32 %v746, %v748
  %v750 = vadd.f32 %v746, %v749
  %vm751 = vweird.f32 %v700
  %vm752 = vweird.f32 %v746
  %vm753 = vmor %vm751, %vm752
  %v754 = vsel %vm753, %v746, %v750
  %v755 = vand.u32 2147483647, %v700
  %vm756 = vcmp.eq.f32.partialorder %v755, 8.507059e+37
  %v757 = vand.u32 %v700, 2147483648
  %v758 = vor.u32 1.1754944e-38, %v757
  %v759 = vsel %vm756, %v758, %v754
  %v760 = vmul.f32 1.0, %v759
  %v761 = vadd.f32 %v632, %v672
  %v762 = vadd.f32 %v633, %v674
  %v763 = vadd.f32 %v634, %v677
  %v764 = vadd.f32 %v635, %v679
  %v765 = vxor.u32 %v761, 2147483648
  %v766 = vxor.u32 %v762, 2147483648
  %v767 = vxor.u32 %v763, 2147483648
  %v768 = vxor.u32 %v764, 2147483648
  %v769 = vmul.f32 %v765, 1.442695
  %v770 = vpow.pop %v769
  %v771 = vmul.f32 %v766, 1.442695
  %v772 = vpow.pop %v771
  %v773 = vmul.f32 %v767, 1.442695
  %v774 = vpow.pop %v773
  %v775 = vmul.f32 %v768, 1.442695
  %v776 = vpow.pop %v775
  %v777 = vadd.f32 %v770, 1.0
  %v778 = vadd.f32 %v772, 1.0
  %v779 = vadd.f32 %v774, 1.0
  %v780 = vadd.f32 %v776, 1.0
  %v781 = vrcp.pop %v777
  %v782 = vmul.f32 %v777, %v781
  %v783 = vsub.f32 1.0, %v782
  %v784 = vmul.f32 %v781, %v783
  %v785 = vadd.f32 %v781, %v784
  %vm786 = vweird.f32 %v777
  %vm787 = vweird.f32 %v781
  %vm788 = vmor %vm786, %vm787
  %v789 = vsel %vm788, %v781, %v785
  %v790 = vand.u32 2147483647, %v777
  %vm791 = vcmp.eq.f32.partialorder %v790, 8.507059e+37
  %v792 = vand.u32 %v777, 2147483648
  %v793 = vor.u32 1.1754944e-38, %v792
  %v794 = vsel %vm791, %v793, %v789
  %v795 = vmul.f32 1.0, %v794
  %v796 = vrcp.pop %v778
  %v797 = vmul.f32 %v778, %v796
  %v798 = vsub.f32 1.0, %v797
  %v799 = vmul.f32 %v796, %v798
  %v800 = vadd.f32 %v796, %v799
  %vm801 = vweird.f32 %v778
  %vm802 = vweird.f32 %v796
  %vm803 = vmor %vm801, %vm802
  %v804 = vsel %vm803, %v796, %v800
  %v805 = vand.u32 2147483647, %v778
  %vm806 = vcmp.eq.f32.partialorder %v805, 8.507059e+37
  %v807 = vand.u32 %v778, 2147483648
  %v808 = vor.u32 1.1754944e-38, %v807
  %v809 = vsel %vm806, %v808, %v804
  %v810 = vmul.f32 1.0, %v809
  %v811 = vrcp.pop %v779
  %v812 = vmul.f32 %v779, %v811
  %v813 = vsub.f32 1.0, %v812
  %v814 = vmul.f32 %v811, %v813
  %v815 = vadd.f32 %v811, %v814
  %vm816 = vweird.f32 %v779
  %vm817 = vweird.f32 %v811
  %vm818 = vmor %vm816, %vm817
  %v819 = vsel %vm818, %v811, %v815
  %v820 = vand.u32 2147483647, %v779
  %vm821 = vcmp.eq.f32.partialorder %v820, 8.507059e+37
  %v822 = vand.u32 %v779, 2147483648
  %v823 = vor.u32 1.1754944e-38, %v822
  %v824 = vsel %vm821, %v823, %v819
  %v825 = vmul.f32 1.0, %v824
  %v826 = vrcp.pop %v780
  %v827 = vmul.f32 %v780, %v826
  %v828 = vsub.f32 1.0, %v827
  %v829 = vmul.f32 %v826, %v828
  %v830 = vadd.f32 %v826, %v829
  %vm831 = vweird.f32 %v780
  %vm832 = vweird.f32 %v826
  %vm833 = vmor %vm831, %vm832
  %v834 = vsel %vm833, %v826, %v830
  %v835 = vand.u32 2147483647, %v780
  %vm836 = vcmp.eq.f32.partialorder %v835, 8.507059e+37
  %v837 = vand.u32 %v780, 2147483648
  %v838 = vor.u32 1.1754944e-38, %v837
  %v839 = vsel %vm836, %v838, %v834
  %v840 = vmul.f32 1.0, %v839
  %v841 = vmul.f32 %v795, %v614
  %v842 = vmul.f32 %v810, %v615
  %v843 = vmul.f32 %v825, %v616
  %v844 = vmul.f32 %v840, %v617
  %v845 = vpack.c.bf16 %v842, %v841
  %v846 = vpack.c.bf16 %v844, %v843
  %847 = vmatpush.bf16.msra.mxu0 0
  %848 = vmatpush.bf16.msra.mxu0 0
  %849 = vmatpush.bf16.msra.mxu0 0
  %850 = vmatpush.bf16.msra.mxu0 0
  %851 = vmatpush.bf16.msra.mxu0 0
  %852 = vmatpush.bf16.msra.mxu0 0
  %853 = vmatpush.bf16.msra.mxu0 %v846
  %854 = vmatpush.bf16.msra.mxu0 %v845
  %855 = vmatmul.bf16.gmra.mxu0 %v299
  %v856 = vpop.f32.mrf.mxu0
  %v857 = vadd.f32 0.0, %v856
  %v858 = vpop.f32.mrf.mxu0
  %v859 = vadd.f32 0.0, %v858
  %860 = vmatmul.bf16.gmra.mxu0 %v302
  %v861 = vpop.f32.mrf.mxu0
  %v862 = vadd.f32 0.0, %v861
  %v863 = vpop.f32.mrf.mxu0
  %v864 = vadd.f32 0.0, %v863
  %865 = vdwg.mxu0
  %v866 = vadd.f32 %v636, %v857
  %v867 = vadd.f32 %v637, %v859
  %v868 = vadd.f32 %v638, %v862
  %v869 = vadd.f32 %v639, %v864
  %v870 = vtanh.pop %v866
  %v871 = vtanh.pop %v867
  %v872 = vtanh.pop %v868
  %v873 = vtanh.pop %v869
  %v874 = vsub.f32 1.0, %v715
  %v875 = vsub.f32 1.0, %v730
  %v876 = vsub.f32 1.0, %v745
  %v877 = vsub.f32 1.0, %v760
  %v878 = vmul.f32 %v874, %v614
  %v879 = vmul.f32 %v875, %v615
  %v880 = vmul.f32 %v876, %v616
  %v881 = vmul.f32 %v877, %v617
  %v882 = vmul.f32 %v715, %v870
  %v883 = vmul.f32 %v730, %v871
  %v884 = vmul.f32 %v745, %v872
  %v885 = vmul.f32 %v760, %v873
  %v886 = vadd.f32 %v878, %v882
  %v887 = vadd.f32 %v879, %v883
  %v888 = vadd.f32 %v880, %v884
  %v889 = vadd.f32 %v881, %v885
  %v890 = vpack.c.bf16 %v886, %v886
  %v891 = vpack.c.bf16 %v887, %v887
  %v892 = vpack.c.bf16 %v888, %v888
  %v893 = vpack.c.bf16 %v889, %v889
  %s894 = scalar_lea.vmem %s4, 32
  %895 = vst [vmem:[%s894] sm:$0xf] %v890
  %896 = vst [vmem:[%s894 + $0x4] sm:$0xf] %v891
  %897 = vst [vmem:[%s894 + $0x8] sm:$0xf] %v892
  %898 = vst [vmem:[%s894 + $0xc] sm:$0xf] %v893
  %s899 = scalar_lea.vmem %s0, 288
  %v900 = vld [vmem:[%s899] sm:$0xff]
  %v901 = vld [vmem:[%s899 + $0x8] sm:$0xff]
  %v902 = vld [vmem:[%s899 + $0x10] sm:$0xff]
  %v903 = vld [vmem:[%s899 + $0x18] sm:$0xff]
  %v904 = vld [vmem:[%s899 + $0x20] sm:$0xff]
  %v905 = vld [vmem:[%s899 + $0x28] sm:$0xff]
  %v906 = vld [vmem:[%s899 + $0x30] sm:$0xff]
  %v907 = vld [vmem:[%s899 + $0x38] sm:$0xff]
  %v908 = vld [vmem:[%s899 + $0x40] sm:$0xff]
  %v909 = vld [vmem:[%s899 + $0x48] sm:$0xff]
  %v910 = vld [vmem:[%s899 + $0x50] sm:$0xff]
  %v911 = vld [vmem:[%s899 + $0x58] sm:$0xff]
  %v916 = vunpack.c.l.b16 %v890
  %v917 = vunpack.c.l.b16 %v891
  %v918 = vunpack.c.l.b16 %v892
  %v919 = vunpack.c.l.b16 %v893
  %v920 = vpack.c.b16 %v917, %v916
  %v921 = vpack.c.b16 %v919, %v918
  %924 = vmatpush.bf16.msra.mxu0 0
  %925 = vmatpush.bf16.msra.mxu0 0
  %926 = vmatpush.bf16.msra.mxu0 0
  %927 = vmatpush.bf16.msra.mxu0 0
  %928 = vmatpush.bf16.msra.mxu0 0
  %929 = vmatpush.bf16.msra.mxu0 0
  %930 = vmatpush.bf16.msra.mxu0 %v921
  %931 = vmatpush.bf16.msra.mxu0 %v920
  %932 = vmatmul.bf16.gmra.mxu0 %v82
  %v933 = vpop.f32.mrf.mxu0
  %v934 = vadd.f32 0.0, %v933
  %v935 = vpop.f32.mrf.mxu0
  %v936 = vadd.f32 0.0, %v935
  %937 = vmatmul.bf16.gmra.mxu0 %v85
  %v938 = vpop.f32.mrf.mxu0
  %v939 = vadd.f32 0.0, %v938
  %v940 = vpop.f32.mrf.mxu0
  %v941 = vadd.f32 0.0, %v940
  %942 = vmatmul.bf16.gmra.mxu0 %v88
  %v943 = vpop.f32.mrf.mxu0
  %v944 = vadd.f32 0.0, %v943
  %v945 = vpop.f32.mrf.mxu0
  %v946 = vadd.f32 0.0, %v945
  %947 = vmatmul.bf16.gmra.mxu0 %v91
  %v948 = vpop.f32.mrf.mxu0
  %v949 = vadd.f32 0.0, %v948
  %v950 = vpop.f32.mrf.mxu0
  %v951 = vadd.f32 0.0, %v950
  %952 = vdwg.mxu0
  %v953 = vadd.f32 %v900, %v934
  %v954 = vadd.f32 %v901, %v936
  %v955 = vadd.f32 %v902, %v939
  %v956 = vadd.f32 %v903, %v941
  %v957 = vxor.u32 %v953, 2147483648
  %v958 = vxor.u32 %v954, 2147483648
  %v959 = vxor.u32 %v955, 2147483648
  %v960 = vxor.u32 %v956, 2147483648
  %v961 = vmul.f32 %v957, 1.442695
  %v962 = vpow.pop %v961
  %v963 = vmul.f32 %v958, 1.442695
  %v964 = vpow.pop %v963
  %v965 = vmul.f32 %v959, 1.442695
  %v966 = vpow.pop %v965
  %v967 = vmul.f32 %v960, 1.442695
  %v968 = vpow.pop %v967
  %v969 = vadd.f32 %v962, 1.0
  %v970 = vadd.f32 %v964, 1.0
  %v971 = vadd.f32 %v966, 1.0
  %v972 = vadd.f32 %v968, 1.0
  %v973 = vrcp.pop %v969
  %v974 = vmul.f32 %v969, %v973
  %v975 = vsub.f32 1.0, %v974
  %v976 = vmul.f32 %v973, %v975
  %v977 = vadd.f32 %v973, %v976
  %vm978 = vweird.f32 %v969
  %vm979 = vweird.f32 %v973
  %vm980 = vmor %vm978, %vm979
  %v981 = vsel %vm980, %v973, %v977
  %v982 = vand.u32 2147483647, %v969
  %vm983 = vcmp.eq.f32.partialorder %v982, 8.507059e+37
  %v984 = vand.u32 %v969, 2147483648
  %v985 = vor.u32 1.1754944e-38, %v984
  %v986 = vsel %vm983, %v985, %v981
  %v987 = vmul.f32 1.0, %v986
  %v988 = vrcp.pop %v970
  %v989 = vmul.f32 %v970, %v988
  %v990 = vsub.f32 1.0, %v989
  %v991 = vmul.f32 %v988, %v990
  %v992 = vadd.f32 %v988, %v991
  %vm993 = vweird.f32 %v970
  %vm994 = vweird.f32 %v988
  %vm995 = vmor %vm993, %vm994
  %v996 = vsel %vm995, %v988, %v992
  %v997 = vand.u32 2147483647, %v970
  %vm998 = vcmp.eq.f32.partialorder %v997, 8.507059e+37
  %v999 = vand.u32 %v970, 2147483648
  %v1000 = vor.u32 1.1754944e-38, %v999
  %v1001 = vsel %vm998, %v1000, %v996
  %v1002 = vmul.f32 1.0, %v1001
  %v1003 = vrcp.pop %v971
  %v1004 = vmul.f32 %v971, %v1003
  %v1005 = vsub.f32 1.0, %v1004
  %v1006 = vmul.f32 %v1003, %v1005
  %v1007 = vadd.f32 %v1003, %v1006
  %vm1008 = vweird.f32 %v971
  %vm1009 = vweird.f32 %v1003
  %vm1010 = vmor %vm1008, %vm1009
  %v1011 = vsel %vm1010, %v1003, %v1007
  %v1012 = vand.u32 2147483647, %v971
  %vm1013 = vcmp.eq.f32.partialorder %v1012, 8.507059e+37
  %v1014 = vand.u32 %v971, 2147483648
  %v1015 = vor.u32 1.1754944e-38, %v1014
  %v1016 = vsel %vm1013, %v1015, %v1011
  %v1017 = vmul.f32 1.0, %v1016
  %v1018 = vrcp.pop %v972
  %v1019 = vmul.f32 %v972, %v1018
  %v1020 = vsub.f32 1.0, %v1019
  %v1021 = vmul.f32 %v1018, %v1020
  %v1022 = vadd.f32 %v1018, %v1021
  %vm1023 = vweird.f32 %v972
  %vm1024 = vweird.f32 %v1018
  %vm1025 = vmor %vm1023, %vm1024
  %v1026 = vsel %vm1025, %v1018, %v1022
  %v1027 = vand.u32 2147483647, %v972
  %vm1028 = vcmp.eq.f32.partialorder %v1027, 8.507059e+37
  %v1029 = vand.u32 %v972, 2147483648
  %v1030 = vor.u32 1.1754944e-38, %v1029
  %v1031 = vsel %vm1028, %v1030, %v1026
  %v1032 = vmul.f32 1.0, %v1031
  %v1033 = vadd.f32 %v904, %v944
  %v1034 = vadd.f32 %v905, %v946
  %v1035 = vadd.f32 %v906, %v949
  %v1036 = vadd.f32 %v907, %v951
  %v1037 = vxor.u32 %v1033, 2147483648
  %v1038 = vxor.u32 %v1034, 2147483648
  %v1039 = vxor.u32 %v1035, 2147483648
  %v1040 = vxor.u32 %v1036, 2147483648
  %v1041 = vmul.f32 %v1037, 1.442695
  %v1042 = vpow.pop %v1041
  %v1043 = vmul.f32 %v1038, 1.442695
  %v1044 = vpow.pop %v1043
  %v1045 = vmul.f32 %v1039, 1.442695
  %v1046 = vpow.pop %v1045
  %v1047 = vmul.f32 %v1040, 1.442695
  %v1048 = vpow.pop %v1047
  %v1049 = vadd.f32 %v1042, 1.0
  %v1050 = vadd.f32 %v1044, 1.0
  %v1051 = vadd.f32 %v1046, 1.0
  %v1052 = vadd.f32 %v1048, 1.0
  %v1053 = vrcp.pop %v1049
  %v1054 = vmul.f32 %v1049, %v1053
  %v1055 = vsub.f32 1.0, %v1054
  %v1056 = vmul.f32 %v1053, %v1055
  %v1057 = vadd.f32 %v1053, %v1056
  %vm1058 = vweird.f32 %v1049
  %vm1059 = vweird.f32 %v1053
  %vm1060 = vmor %vm1058, %vm1059
  %v1061 = vsel %vm1060, %v1053, %v1057
  %v1062 = vand.u32 2147483647, %v1049
  %vm1063 = vcmp.eq.f32.partialorder %v1062, 8.507059e+37
  %v1064 = vand.u32 %v1049, 2147483648
  %v1065 = vor.u32 1.1754944e-38, %v1064
  %v1066 = vsel %vm1063, %v1065, %v1061
  %v1067 = vmul.f32 1.0, %v1066
  %v1068 = vrcp.pop %v1050
  %v1069 = vmul.f32 %v1050, %v1068
  %v1070 = vsub.f32 1.0, %v1069
  %v1071 = vmul.f32 %v1068, %v1070
  %v1072 = vadd.f32 %v1068, %v1071
  %vm1073 = vweird.f32 %v1050
  %vm1074 = vweird.f32 %v1068
  %vm1075 = vmor %vm1073, %vm1074
  %v1076 = vsel %vm1075, %v1068, %v1072
  %v1077 = vand.u32 2147483647, %v1050
  %vm1078 = vcmp.eq.f32.partialorder %v1077, 8.507059e+37
  %v1079 = vand.u32 %v1050, 2147483648
  %v1080 = vor.u32 1.1754944e-38, %v1079
  %v1081 = vsel %vm1078, %v1080, %v1076
  %v1082 = vmul.f32 1.0, %v1081
  %v1083 = vrcp.pop %v1051
  %v1084 = vmul.f32 %v1051, %v1083
  %v1085 = vsub.f32 1.0, %v1084
  %v1086 = vmul.f32 %v1083, %v1085
  %v1087 = vadd.f32 %v1083, %v1086
  %vm1088 = vweird.f32 %v1051
  %vm1089 = vweird.f32 %v1083
  %vm1090 = vmor %vm1088, %vm1089
  %v1091 = vsel %vm1090, %v1083, %v1087
  %v1092 = vand.u32 2147483647, %v1051
  %vm1093 = vcmp.eq.f32.partialorder %v1092, 8.507059e+37
  %v1094 = vand.u32 %v1051, 2147483648
  %v1095 = vor.u32 1.1754944e-38, %v1094
  %v1096 = vsel %vm1093, %v1095, %v1091
  %v1097 = vmul.f32 1.0, %v1096
  %v1098 = vrcp.pop %v1052
  %v1099 = vmul.f32 %v1052, %v1098
  %v1100 = vsub.f32 1.0, %v1099
  %v1101 = vmul.f32 %v1098, %v1100
  %v1102 = vadd.f32 %v1098, %v1101
  %vm1103 = vweird.f32 %v1052
  %vm1104 = vweird.f32 %v1098
  %vm1105 = vmor %vm1103, %vm1104
  %v1106 = vsel %vm1105, %v1098, %v1102
  %v1107 = vand.u32 2147483647, %v1052
  %vm1108 = vcmp.eq.f32.partialorder %v1107, 8.507059e+37
  %v1109 = vand.u32 %v1052, 2147483648
  %v1110 = vor.u32 1.1754944e-38, %v1109
  %v1111 = vsel %vm1108, %v1110, %v1106
  %v1112 = vmul.f32 1.0, %v1111
  %v1113 = vmul.f32 %v1067, %v886
  %v1114 = vmul.f32 %v1082, %v887
  %v1115 = vmul.f32 %v1097, %v888
  %v1116 = vmul.f32 %v1112, %v889
  %v1117 = vpack.c.bf16 %v1114, %v1113
  %v1118 = vpack.c.bf16 %v1116, %v1115
  %1119 = vmatpush.bf16.msra.mxu0 0
  %1120 = vmatpush.bf16.msra.mxu0 0
  %1121 = vmatpush.bf16.msra.mxu0 0
  %1122 = vmatpush.bf16.msra.mxu0 0
  %1123 = vmatpush.bf16.msra.mxu0 0
  %1124 = vmatpush.bf16.msra.mxu0 0
  %1125 = vmatpush.bf16.msra.mxu0 %v1118
  %1126 = vmatpush.bf16.msra.mxu0 %v1117
  %1127 = vmatmul.bf16.gmra.mxu0 %v299
  %v1128 = vpop.f32.mrf.mxu0
  %v1129 = vadd.f32 0.0, %v1128
  %v1130 = vpop.f32.mrf.mxu0
  %v1131 = vadd.f32 0.0, %v1130
  %1132 = vmatmul.bf16.gmra.mxu0 %v302
  %v1133 = vpop.f32.mrf.mxu0
  %v1134 = vadd.f32 0.0, %v1133
  %v1135 = vpop.f32.mrf.mxu0
  %v1136 = vadd.f32 0.0, %v1135
  %1137 = vdwg.mxu0
  %v1138 = vadd.f32 %v908, %v1129
  %v1139 = vadd.f32 %v909, %v1131
  %v1140 = vadd.f32 %v910, %v1134
  %v1141 = vadd.f32 %v911, %v1136
  %v1142 = vtanh.pop %v1138
  %v1143 = vtanh.pop %v1139
  %v1144 = vtanh.pop %v1140
  %v1145 = vtanh.pop %v1141
  %v1146 = vsub.f32 1.0, %v987
  %v1147 = vsub.f32 1.0, %v1002
  %v1148 = vsub.f32 1.0, %v1017
  %v1149 = vsub.f32 1.0, %v1032
  %v1150 = vmul.f32 %v1146, %v886
  %v1151 = vmul.f32 %v1147, %v887
  %v1152 = vmul.f32 %v1148, %v888
  %v1153 = vmul.f32 %v1149, %v889
  %v1154 = vmul.f32 %v987, %v1142
  %v1155 = vmul.f32 %v1002, %v1143
  %v1156 = vmul.f32 %v1017, %v1144
  %v1157 = vmul.f32 %v1032, %v1145
  %v1158 = vadd.f32 %v1150, %v1154
  %v1159 = vadd.f32 %v1151, %v1155
  %v1160 = vadd.f32 %v1152, %v1156
  %v1161 = vadd.f32 %v1153, %v1157
  %v1162 = vpack.c.bf16 %v1158, %v1158
  %v1163 = vpack.c.bf16 %v1159, %v1159
  %v1164 = vpack.c.bf16 %v1160, %v1160
  %v1165 = vpack.c.bf16 %v1161, %v1161
  %s1166 = scalar_lea.vmem %s4, 48
  %1167 = vst [vmem:[%s1166] sm:$0xf] %v1162
  %1168 = vst [vmem:[%s1166 + $0x4] sm:$0xf] %v1163
  %1169 = vst [vmem:[%s1166 + $0x8] sm:$0xf] %v1164
  %1170 = vst [vmem:[%s1166 + $0xc] sm:$0xf] %v1165
  %1171 = vst [vmem:[#allocation2] sm:$0xff] %v1158
  %1172 = vst [vmem:[#allocation2 + $0x8] sm:$0xff] %v1159
  %1173 = vst [vmem:[#allocation2 + $0x10] sm:$0xff] %v1160
  %1174 = vst [vmem:[#allocation2 + $0x18] sm:$0xff] %v1161
  // Predicated region
  $region22: #{grcu_forward.2} parent=0 // pred_check
    _
  $region23: #{grcu_forward.2} parent=0 // pred_check_branch
    %1176 = sbr.rel (0) target = $region25
  $region24: #{grcu_forward.2} parent=0 // pred_region
    _
  $region25: #{grcu_forward.2} parent=0 // pred_fallthru
    _
  // Predicated region
  $region26: #{grcu_forward.2} parent=0 // pred_check
    _
  $region27: #{grcu_forward.2} parent=0 // pred_check_branch
    %1178 = sbr.rel (0) target = $region29
  $region28: #{grcu_forward.2} parent=0 // pred_region
    _
  $region29: #{grcu_forward.2} parent=0 // pred_fallthru
    _

</llo_original>
